<compile_context>
chip_gen: v7x
topology: tpu7x:2x2x1
jax: 0.10.0
libtpu: 0.0.40
codegen_flags: <defaults>
</compile_context>

<pallas_src>
import numpy as np
import jax
import jax.numpy as jnp
from jax import lax
from jax.experimental import pallas as pl
from jax.experimental.pallas import tpu as pltpu

WIN_SIZE = 11
WIN_SIGMA = 1.5
K1 = 0.01
K2 = 0.03
DATA_RANGE = 1.0
GAMMA = 2.2

# bf16 = fast native MXU path (default, per perf review); float32 = strict
# parity with the f32 PyTorch reference (MXU-emulated multi-pass matmuls).
FILTER_DTYPE = jnp.bfloat16


def _gauss_window_1d():
    # Identical to pytorch_msssim._fspecial_gauss_1d (symmetric window).
    coords = np.arange(WIN_SIZE, dtype=np.float64) - WIN_SIZE // 2
    g = np.exp(-(coords ** 2) / (2.0 * WIN_SIGMA ** 2))
    g /= g.sum()
    return tuple(float(v) for v in g)


_GAUSS_TAPS = _gauss_window_1d()


def _band_matrix(n_rows, n_cols, lower):
    """Banded Gaussian matrix built in-kernel (iota + 11 selects).

    lower=True : M[r, c] = g[r - c]   (horizontal pass, img @ Gw)
    lower=False: M[r, c] = g[c - r]   (vertical pass,   Gh @ img)
    """
    r = lax.broadcasted_iota(jnp.int32, (n_rows, n_cols), 0)
    c = lax.broadcasted_iota(jnp.int32, (n_rows, n_cols), 1)
    d = (r - c) if lower else (c - r)
    m = jnp.zeros((n_rows, n_cols), jnp.float32)
    for t, g_t in enumerate(_GAUSS_TAPS):
        m = jnp.where(d == t, np.float32(g_t), m)
    return m.astype(FILTER_DTYPE)


def _recip(x):
    # EUP approximate reciprocal + one Newton-Raphson step (~f32 accuracy).
    r = pl.reciprocal(x, approx=True)
    return r * (2.0 - x * r)


def _powf(x, p):
    # x ** p for x >= 0 (tonemap-domain inputs are non-negative); 0 ** p == 0.
    safe = jnp.where(x > 0.0, x, 1.0)
    return jnp.where(x > 0.0, jnp.exp(p * jnp.log(safe)), 0.0)


def _aces(x):
    a, b, c, d, e = 2.51, 0.03, 2.43, 0.59, 0.14
    num = x * (a * x + b)
    den = x * (c * x + d) + e                 # >= 0.14, never zero
    return jnp.clip(num * _recip(den), 0.0, 1.0)


def _aces_with_gamma(x):
    # TODO(synk): bf16 exp/log on v6e/v7x would ~2x EUP throughput at a
    # precision cost; kept f32 for parity (v5e has no bf16 EUP path anyway).
    return _powf(_aces(_powf(x, GAMMA)), 1.0 / GAMMA)


def _ssim_kernel(pred_ref, target_ref, out_ref):
    bt, h, w = pred_ref.shape
    hout = h - WIN_SIZE + 1
    wout = w - WIN_SIZE + 1
    c1 = (K1 * DATA_RANGE) ** 2
    c2 = (K2 * DATA_RANGE) ** 2

    # Tone-map the whole block at once (elementwise VPU/EUP work, no loop).
    x = _aces_with_gamma(pred_ref[...].astype(jnp.float32)).reshape(bt * h, w)
    y = _aces_with_gamma(target_ref[...].astype(jnp.float32)).reshape(bt * h, w)

    # Stack the five maps row-wise -> one big MXU operand (5*Bt*H, W).
    maps = jnp.concatenate([x, y, x * x, y * y, x * y], axis=0)
    maps = maps.astype(FILTER_DTYPE)

    # Banded Gaussian matrices generated from the 11 taps (no HBM traffic,
    # no double-buffered constant operands).
    gw = _band_matrix(w, wout, lower=True)      # (W, Wout)
    gh = _band_matrix(hout, h, lower=False)     # (Hout, H)

    # Horizontal pass: single large matmul, f32 accumulate.
    a = jnp.dot(maps, gw, preferred_element_type=jnp.float32)    # (5*Bt*H, Wout)

    # Vertical pass: one batched matmul over the 5*Bt slabs.
    a3 = a.astype(FILTER_DTYPE).reshape(5 * bt, h, wout)
    gh_b = jnp.broadcast_to(gh, (5 * bt, hout, h))
    f = jnp.einsum("gij,gjk->gik", gh_b, a3,
                   preferred_element_type=jnp.float32)           # (5*Bt, Hout, Wout)

    mu1 = f[0 * bt:1 * bt]
    mu2 = f[1 * bt:2 * bt]
    e_xx = f[2 * bt:3 * bt]
    e_yy = f[3 * bt:4 * bt]
    e_xy = f[4 * bt:5 * bt]

    mu1_sq = mu1 * mu1
    mu2_sq = mu2 * mu2
    mu1_mu2 = mu1 * mu2
    sigma1_sq = e_xx - mu1_sq
    sigma2_sq = e_yy - mu2_sq
    sigma12 = e_xy - mu1_mu2

    # max(.,0) is an identity in exact arithmetic (variances are >= 0) and
    # guards against bf16-filter cancellation making the denominator negative.
    cs_den = jnp.maximum(sigma1_sq + sigma2_sq, 0.0) + c2
    cs_map = (2.0 * sigma12 + c2) * _recip(cs_den)
    ssim_map = (2.0 * mu1_mu2 + c1) * _recip(mu1_sq + mu2_sq + c1) * cs_map

    # Lane-dense (8, 128) broadcast store of this block's partial SSIM sum.
    total = jnp.sum(ssim_map)
    out_ref[...] = jnp.full(out_ref.shape, total, dtype=jnp.float32)


def _pick_block_images(b, h, w, max_elems):
    """Largest divisor Bt of b with Bt*H*W <= max_elems and grid = b//Bt >= 2
    (when b >= 2), so both TensorCores get work under ("parallel",)."""
    best = 1
    for d in range(1, b + 1):
        if b % d:
            continue
        if d * h * w > max_elems:
            continue
        if b >= 2 and b // d < 2:
            continue
        best = d
    return best


def ssim_loss(pred, target, *, max_elems=256 * 1024):
    """pred, target: (N, C, H, W) float arrays. Returns scalar loss.

    `max_elems` bounds the per-block image elements; the default is sized for
    v7x's 64 MiB VMEM and can be raised ~2-4x on 128-MiB v5e/v6e parts.
    """
    assert pred.shape == target.shape
    n, c, h, w = pred.shape
    assert h >= WIN_SIZE and w >= WIN_SIZE, "spatial dims must be >= win_size (11)"
    # TODO(synk): spatial (halo) tiling for images whose working set exceeds
    # the VMEM budget; until then, fail loudly rather than blow VMEM.
    assert h * w <= max_elems, (
        f"single image ({h}x{w}) exceeds the per-block VMEM budget; "
        "needs spatial halo tiling")

    b = n * c
    hout = h - WIN_SIZE + 1
    wout = w - WIN_SIZE + 1

    # bf16 on the wire halves HBM traffic; f32 is restored inside the kernel
    # before the (EUP-heavy) ACES/gamma tonemap.
    p = pred.reshape(b, h, w).astype(jnp.bfloat16)
    t = target.reshape(b, h, w).astype(jnp.bfloat16)

    bt = _pick_block_images(b, h, w, max_elems)
    grid = b // bt

    partials = pl.pallas_call(
        _ssim_kernel,
        out_shape=jax.ShapeDtypeStruct((grid, 8, 128), jnp.float32),
        grid_spec=pltpu.PrefetchScalarGridSpec(
            num_scalar_prefetch=0,
            grid=(grid,),
            in_specs=[
                pl.BlockSpec((bt, h, w), lambda i: (i, 0, 0)),   # pred tile
                pl.BlockSpec((bt, h, w), lambda i: (i, 0, 0)),   # target tile
            ],
            out_specs=pl.BlockSpec((1, 8, 128), lambda i: (i, 0, 0)),
        ),
        compiler_params=pltpu.CompilerParams(
            dimension_semantics=("parallel",),
            vmem_limit_bytes=48 * 1024 * 1024,
        ),
    )(p, t)

    # Every block covers the same number of valid pixels, so summing partials
    # and dividing by the total count equals pytorch_msssim's global mean.
    ssim_mean = jnp.sum(partials[:, 0, 0]) / float(b * hout * wout)
    return 1.0 - ssim_mean


if __name__ == "__main__":
    key = jax.random.PRNGKey(0)
    kp, kt = jax.random.split(key)
    # Image-like inputs in [0, 1): N=2, C=4, H=W=16 (>= 11x11 window).
    pred = jax.random.uniform(kp, (2, 4, 16, 16), dtype=jnp.float32)
    target = jax.random.uniform(kt, (2, 4, 16, 16), dtype=jnp.float32)

    loss = ssim_loss(pred, target)
    jax.block_until_ready(loss)
    print("KERNEL_OK")
</pallas_src>

<mosaic_0001>
module attributes {stable_mosaic.version = 11 : i64} {
  func.func @_ssim_kernel(%arg0: i32, %arg1: memref<4x16x16xbf16, #tpu.memory_space<vmem>>, %arg2: memref<4x16x16xbf16, #tpu.memory_space<vmem>>, %arg3: memref<1x8x128xf32, #tpu.memory_space<vmem>>) attributes {dimension_semantics = [#tpu.dimension_semantics<parallel>], iteration_bounds = array<i64: 2>, scalar_prefetch = 0 : i64, scratch_operands = 0 : i64, tpu.core_type = #tpu.core_type<tc>, window_params = [{transform_indices = @transform_0, window_bounds = array<i64: 4, 16, 16>}, {transform_indices = @transform_1, window_bounds = array<i64: 4, 16, 16>}, {transform_indices = @transform_2, window_bounds = array<i64: 1, 8, 128>}]} {
    %c0 = arith.constant 0 : index
    %c0_0 = arith.constant 0 : index
    %c0_1 = arith.constant 0 : index
    %0 = vector.load %arg1[%c0, %c0_0, %c0_1] : memref<4x16x16xbf16, #tpu.memory_space<vmem>>, vector<4x16x16xbf16>
    %1 = arith.extf %0 : vector<4x16x16xbf16> to vector<4x16x16xf32>
    %cst = arith.constant 0.000000e+00 : f32
    %2 = vector.broadcast %cst : f32 to vector<4x16x16xf32>
    %3 = arith.cmpf ogt, %1, %2 : vector<4x16x16xf32>
    %cst_2 = arith.constant 1.000000e+00 : f32
    %4 = vector.broadcast %cst_2 : f32 to vector<4x16x16xf32>
    %5 = arith.select %3, %1, %4 : vector<4x16x16xi1>, vector<4x16x16xf32>
    %cst_3 = arith.constant 0.000000e+00 : f32
    %6 = vector.broadcast %cst_3 : f32 to vector<4x16x16xf32>
    %7 = arith.cmpf ogt, %1, %6 : vector<4x16x16xf32>
    %8 = math.log %5 : vector<4x16x16xf32>
    %cst_4 = arith.constant 2.200000e+00 : f32
    %9 = vector.broadcast %cst_4 : f32 to vector<4x16x16xf32>
    %10 = arith.mulf %9, %8 : vector<4x16x16xf32>
    %11 = math.exp %10 : vector<4x16x16xf32>
    %cst_5 = arith.constant 0.000000e+00 : f32
    %12 = vector.broadcast %cst_5 : f32 to vector<4x16x16xf32>
    %13 = arith.select %7, %11, %12 : vector<4x16x16xi1>, vector<4x16x16xf32>
    %cst_6 = arith.constant 2.510000e+00 : f32
    %14 = vector.broadcast %cst_6 : f32 to vector<4x16x16xf32>
    %15 = arith.mulf %14, %13 : vector<4x16x16xf32>
    %cst_7 = arith.constant 3.000000e-02 : f32
    %16 = vector.broadcast %cst_7 : f32 to vector<4x16x16xf32>
    %17 = arith.addf %15, %16 : vector<4x16x16xf32>
    %18 = arith.mulf %13, %17 : vector<4x16x16xf32>
    %cst_8 = arith.constant 2.430000e+00 : f32
    %19 = vector.broadcast %cst_8 : f32 to vector<4x16x16xf32>
    %20 = arith.mulf %19, %13 : vector<4x16x16xf32>
    %cst_9 = arith.constant 5.900000e-01 : f32
    %21 = vector.broadcast %cst_9 : f32 to vector<4x16x16xf32>
    %22 = arith.addf %20, %21 : vector<4x16x16xf32>
    %23 = arith.mulf %13, %22 : vector<4x16x16xf32>
    %cst_10 = arith.constant 1.400000e-01 : f32
    %24 = vector.broadcast %cst_10 : f32 to vector<4x16x16xf32>
    %25 = arith.addf %23, %24 : vector<4x16x16xf32>
    %26 = tpu.reciprocal %25 {approx = true} : vector<4x16x16xf32> -> vector<4x16x16xf32>
    %27 = arith.mulf %25, %26 : vector<4x16x16xf32>
    %cst_11 = arith.constant 2.000000e+00 : f32
    %28 = vector.broadcast %cst_11 : f32 to vector<4x16x16xf32>
    %29 = arith.subf %28, %27 : vector<4x16x16xf32>
    %30 = arith.mulf %26, %29 : vector<4x16x16xf32>
    %31 = arith.mulf %18, %30 : vector<4x16x16xf32>
    %cst_12 = arith.constant 0.000000e+00 : f32
    %cst_13 = arith.constant 1.000000e+00 : f32
    %32 = vector.broadcast %cst_12 : f32 to vector<4x16x16xf32>
    %33 = arith.maximumf %32, %31 : vector<4x16x16xf32>
    %34 = vector.broadcast %cst_13 : f32 to vector<4x16x16xf32>
    %35 = arith.minimumf %34, %33 : vector<4x16x16xf32>
    %cst_14 = arith.constant 0.000000e+00 : f32
    %36 = vector.broadcast %cst_14 : f32 to vector<4x16x16xf32>
    %37 = arith.cmpf ogt, %35, %36 : vector<4x16x16xf32>
    %cst_15 = arith.constant 1.000000e+00 : f32
    %38 = vector.broadcast %cst_15 : f32 to vector<4x16x16xf32>
    %39 = arith.select %37, %35, %38 : vector<4x16x16xi1>, vector<4x16x16xf32>
    %cst_16 = arith.constant 0.000000e+00 : f32
    %40 = vector.broadcast %cst_16 : f32 to vector<4x16x16xf32>
    %41 = arith.cmpf ogt, %35, %40 : vector<4x16x16xf32>
    %42 = math.log %39 : vector<4x16x16xf32>
    %cst_17 = arith.constant 0.454545468 : f32
    %43 = vector.broadcast %cst_17 : f32 to vector<4x16x16xf32>
    %44 = arith.mulf %43, %42 : vector<4x16x16xf32>
    %45 = math.exp %44 : vector<4x16x16xf32>
    %cst_18 = arith.constant 0.000000e+00 : f32
    %46 = vector.broadcast %cst_18 : f32 to vector<4x16x16xf32>
    %47 = arith.select %41, %45, %46 : vector<4x16x16xi1>, vector<4x16x16xf32>
    %48 = vector.shape_cast %47 : vector<4x16x16xf32> to vector<64x16xf32>
    %c0_19 = arith.constant 0 : index
    %c0_20 = arith.constant 0 : index
    %c0_21 = arith.constant 0 : index
    %49 = vector.load %arg2[%c0_19, %c0_20, %c0_21] : memref<4x16x16xbf16, #tpu.memory_space<vmem>>, vector<4x16x16xbf16>
    %50 = arith.extf %49 : vector<4x16x16xbf16> to vector<4x16x16xf32>
    %cst_22 = arith.constant 0.000000e+00 : f32
    %51 = vector.broadcast %cst_22 : f32 to vector<4x16x16xf32>
    %52 = arith.cmpf ogt, %50, %51 : vector<4x16x16xf32>
    %cst_23 = arith.constant 1.000000e+00 : f32
    %53 = vector.broadcast %cst_23 : f32 to vector<4x16x16xf32>
    %54 = arith.select %52, %50, %53 : vector<4x16x16xi1>, vector<4x16x16xf32>
    %cst_24 = arith.constant 0.000000e+00 : f32
    %55 = vector.broadcast %cst_24 : f32 to vector<4x16x16xf32>
    %56 = arith.cmpf ogt, %50, %55 : vector<4x16x16xf32>
    %57 = math.log %54 : vector<4x16x16xf32>
    %cst_25 = arith.constant 2.200000e+00 : f32
    %58 = vector.broadcast %cst_25 : f32 to vector<4x16x16xf32>
    %59 = arith.mulf %58, %57 : vector<4x16x16xf32>
    %60 = math.exp %59 : vector<4x16x16xf32>
    %cst_26 = arith.constant 0.000000e+00 : f32
    %61 = vector.broadcast %cst_26 : f32 to vector<4x16x16xf32>
    %62 = arith.select %56, %60, %61 : vector<4x16x16xi1>, vector<4x16x16xf32>
    %cst_27 = arith.constant 2.510000e+00 : f32
    %63 = vector.broadcast %cst_27 : f32 to vector<4x16x16xf32>
    %64 = arith.mulf %63, %62 : vector<4x16x16xf32>
    %cst_28 = arith.constant 3.000000e-02 : f32
    %65 = vector.broadcast %cst_28 : f32 to vector<4x16x16xf32>
    %66 = arith.addf %64, %65 : vector<4x16x16xf32>
    %67 = arith.mulf %62, %66 : vector<4x16x16xf32>
    %cst_29 = arith.constant 2.430000e+00 : f32
    %68 = vector.broadcast %cst_29 : f32 to vector<4x16x16xf32>
    %69 = arith.mulf %68, %62 : vector<4x16x16xf32>
    %cst_30 = arith.constant 5.900000e-01 : f32
    %70 = vector.broadcast %cst_30 : f32 to vector<4x16x16xf32>
    %71 = arith.addf %69, %70 : vector<4x16x16xf32>
    %72 = arith.mulf %62, %71 : vector<4x16x16xf32>
    %cst_31 = arith.constant 1.400000e-01 : f32
    %73 = vector.broadcast %cst_31 : f32 to vector<4x16x16xf32>
    %74 = arith.addf %72, %73 : vector<4x16x16xf32>
    %75 = tpu.reciprocal %74 {approx = true} : vector<4x16x16xf32> -> vector<4x16x16xf32>
    %76 = arith.mulf %74, %75 : vector<4x16x16xf32>
    %cst_32 = arith.constant 2.000000e+00 : f32
    %77 = vector.broadcast %cst_32 : f32 to vector<4x16x16xf32>
    %78 = arith.subf %77, %76 : vector<4x16x16xf32>
    %79 = arith.mulf %75, %78 : vector<4x16x16xf32>
    %80 = arith.mulf %67, %79 : vector<4x16x16xf32>
    %cst_33 = arith.constant 0.000000e+00 : f32
    %cst_34 = arith.constant 1.000000e+00 : f32
    %81 = vector.broadcast %cst_33 : f32 to vector<4x16x16xf32>
    %82 = arith.maximumf %81, %80 : vector<4x16x16xf32>
    %83 = vector.broadcast %cst_34 : f32 to vector<4x16x16xf32>
    %84 = arith.minimumf %83, %82 : vector<4x16x16xf32>
    %cst_35 = arith.constant 0.000000e+00 : f32
    %85 = vector.broadcast %cst_35 : f32 to vector<4x16x16xf32>
    %86 = arith.cmpf ogt, %84, %85 : vector<4x16x16xf32>
    %cst_36 = arith.constant 1.000000e+00 : f32
    %87 = vector.broadcast %cst_36 : f32 to vector<4x16x16xf32>
    %88 = arith.select %86, %84, %87 : vector<4x16x16xi1>, vector<4x16x16xf32>
    %cst_37 = arith.constant 0.000000e+00 : f32
    %89 = vector.broadcast %cst_37 : f32 to vector<4x16x16xf32>
    %90 = arith.cmpf ogt, %84, %89 : vector<4x16x16xf32>
    %91 = math.log %88 : vector<4x16x16xf32>
    %cst_38 = arith.constant 0.454545468 : f32
    %92 = vector.broadcast %cst_38 : f32 to vector<4x16x16xf32>
    %93 = arith.mulf %92, %91 : vector<4x16x16xf32>
    %94 = math.exp %93 : vector<4x16x16xf32>
    %cst_39 = arith.constant 0.000000e+00 : f32
    %95 = vector.broadcast %cst_39 : f32 to vector<4x16x16xf32>
    %96 = arith.select %90, %94, %95 : vector<4x16x16xi1>, vector<4x16x16xf32>
    %97 = vector.shape_cast %96 : vector<4x16x16xf32> to vector<64x16xf32>
    %98 = arith.mulf %48, %48 : vector<64x16xf32>
    %99 = arith.mulf %97, %97 : vector<64x16xf32>
    %100 = arith.mulf %48, %97 : vector<64x16xf32>
    %101 = tpu.concatenate %48, %97, %98, %99, %100 in 0 : vector<64x16xf32>, vector<64x16xf32>, vector<64x16xf32>, vector<64x16xf32>, vector<64x16xf32> -> vector<320x16xf32>
    %102 = arith.truncf %101 : vector<320x16xf32> to vector<320x16xbf16>
    %103 = tpu.iota {dimensions = array<i32: 0>} : vector<16x6xi32>
    %104 = tpu.iota {dimensions = array<i32: 1>} : vector<16x6xi32>
    %105 = arith.subi %103, %104 : vector<16x6xi32>
    %cst_40 = arith.constant 0.000000e+00 : f32
    %106 = vector.broadcast %cst_40 : f32 to vector<16x6xf32>
    %c0_i32 = arith.constant 0 : i32
    %107 = vector.broadcast %c0_i32 : i32 to vector<16x6xi32>
    %108 = arith.cmpi eq, %105, %107 : vector<16x6xi32>
    %cst_41 = arith.constant 0.00102838012 : f32
    %109 = vector.broadcast %cst_41 : f32 to vector<16x6xf32>
    %110 = arith.select %108, %109, %106 : vector<16x6xi1>, vector<16x6xf32>
    %c1_i32 = arith.constant 1 : i32
    %111 = vector.broadcast %c1_i32 : i32 to vector<16x6xi32>
    %112 = arith.cmpi eq, %105, %111 : vector<16x6xi32>
    %cst_42 = arith.constant 0.00759875821 : f32
    %113 = vector.broadcast %cst_42 : f32 to vector<16x6xf32>
    %114 = arith.select %112, %113, %110 : vector<16x6xi1>, vector<16x6xf32>
    %c2_i32 = arith.constant 2 : i32
    %115 = vector.broadcast %c2_i32 : i32 to vector<16x6xi32>
    %116 = arith.cmpi eq, %105, %115 : vector<16x6xi32>
    %cst_43 = arith.constant 0.0360007733 : f32
    %117 = vector.broadcast %cst_43 : f32 to vector<16x6xf32>
    %118 = arith.select %116, %117, %114 : vector<16x6xi1>, vector<16x6xf32>
    %c3_i32 = arith.constant 3 : i32
    %119 = vector.broadcast %c3_i32 : i32 to vector<16x6xi32>
    %120 = arith.cmpi eq, %105, %119 : vector<16x6xi32>
    %cst_44 = arith.constant 0.109360687 : f32
    %121 = vector.broadcast %cst_44 : f32 to vector<16x6xf32>
    %122 = arith.select %120, %121, %118 : vector<16x6xi1>, vector<16x6xf32>
    %c4_i32 = arith.constant 4 : i32
    %123 = vector.broadcast %c4_i32 : i32 to vector<16x6xi32>
    %124 = arith.cmpi eq, %105, %123 : vector<16x6xi32>
    %cst_45 = arith.constant 0.213005543 : f32
    %125 = vector.broadcast %cst_45 : f32 to vector<16x6xf32>
    %126 = arith.select %124, %125, %122 : vector<16x6xi1>, vector<16x6xf32>
    %c5_i32 = arith.constant 5 : i32
    %127 = vector.broadcast %c5_i32 : i32 to vector<16x6xi32>
    %128 = arith.cmpi eq, %105, %127 : vector<16x6xi32>
    %cst_46 = arith.constant 0.266011715 : f32
    %129 = vector.broadcast %cst_46 : f32 to vector<16x6xf32>
    %130 = arith.select %128, %129, %126 : vector<16x6xi1>, vector<16x6xf32>
    %c6_i32 = arith.constant 6 : i32
    %131 = vector.broadcast %c6_i32 : i32 to vector<16x6xi32>
    %132 = arith.cmpi eq, %105, %131 : vector<16x6xi32>
    %cst_47 = arith.constant 0.213005543 : f32
    %133 = vector.broadcast %cst_47 : f32 to vector<16x6xf32>
    %134 = arith.select %132, %133, %130 : vector<16x6xi1>, vector<16x6xf32>
    %c7_i32 = arith.constant 7 : i32
    %135 = vector.broadcast %c7_i32 : i32 to vector<16x6xi32>
    %136 = arith.cmpi eq, %105, %135 : vector<16x6xi32>
    %cst_48 = arith.constant 0.109360687 : f32
    %137 = vector.broadcast %cst_48 : f32 to vector<16x6xf32>
    %138 = arith.select %136, %137, %134 : vector<16x6xi1>, vector<16x6xf32>
    %c8_i32 = arith.constant 8 : i32
    %139 = vector.broadcast %c8_i32 : i32 to vector<16x6xi32>
    %140 = arith.cmpi eq, %105, %139 : vector<16x6xi32>
    %cst_49 = arith.constant 0.0360007733 : f32
    %141 = vector.broadcast %cst_49 : f32 to vector<16x6xf32>
    %142 = arith.select %140, %141, %138 : vector<16x6xi1>, vector<16x6xf32>
    %c9_i32 = arith.constant 9 : i32
    %143 = vector.broadcast %c9_i32 : i32 to vector<16x6xi32>
    %144 = arith.cmpi eq, %105, %143 : vector<16x6xi32>
    %cst_50 = arith.constant 0.00759875821 : f32
    %145 = vector.broadcast %cst_50 : f32 to vector<16x6xf32>
    %146 = arith.select %144, %145, %142 : vector<16x6xi1>, vector<16x6xf32>
    %c10_i32 = arith.constant 10 : i32
    %147 = vector.broadcast %c10_i32 : i32 to vector<16x6xi32>
    %148 = arith.cmpi eq, %105, %147 : vector<16x6xi32>
    %cst_51 = arith.constant 0.00102838012 : f32
    %149 = vector.broadcast %cst_51 : f32 to vector<16x6xf32>
    %150 = arith.select %148, %149, %146 : vector<16x6xi1>, vector<16x6xf32>
    %151 = arith.truncf %150 : vector<16x6xf32> to vector<16x6xbf16>
    %152 = tpu.iota {dimensions = array<i32: 0>} : vector<6x16xi32>
    %153 = tpu.iota {dimensions = array<i32: 1>} : vector<6x16xi32>
    %154 = arith.subi %153, %152 : vector<6x16xi32>
    %cst_52 = arith.constant 0.000000e+00 : f32
    %155 = vector.broadcast %cst_52 : f32 to vector<6x16xf32>
    %c0_i32_53 = arith.constant 0 : i32
    %156 = vector.broadcast %c0_i32_53 : i32 to vector<6x16xi32>
    %157 = arith.cmpi eq, %154, %156 : vector<6x16xi32>
    %cst_54 = arith.constant 0.00102838012 : f32
    %158 = vector.broadcast %cst_54 : f32 to vector<6x16xf32>
    %159 = arith.select %157, %158, %155 : vector<6x16xi1>, vector<6x16xf32>
    %c1_i32_55 = arith.constant 1 : i32
    %160 = vector.broadcast %c1_i32_55 : i32 to vector<6x16xi32>
    %161 = arith.cmpi eq, %154, %160 : vector<6x16xi32>
    %cst_56 = arith.constant 0.00759875821 : f32
    %162 = vector.broadcast %cst_56 : f32 to vector<6x16xf32>
    %163 = arith.select %161, %162, %159 : vector<6x16xi1>, vector<6x16xf32>
    %c2_i32_57 = arith.constant 2 : i32
    %164 = vector.broadcast %c2_i32_57 : i32 to vector<6x16xi32>
    %165 = arith.cmpi eq, %154, %164 : vector<6x16xi32>
    %cst_58 = arith.constant 0.0360007733 : f32
    %166 = vector.broadcast %cst_58 : f32 to vector<6x16xf32>
    %167 = arith.select %165, %166, %163 : vector<6x16xi1>, vector<6x16xf32>
    %c3_i32_59 = arith.constant 3 : i32
    %168 = vector.broadcast %c3_i32_59 : i32 to vector<6x16xi32>
    %169 = arith.cmpi eq, %154, %168 : vector<6x16xi32>
    %cst_60 = arith.constant 0.109360687 : f32
    %170 = vector.broadcast %cst_60 : f32 to vector<6x16xf32>
    %171 = arith.select %169, %170, %167 : vector<6x16xi1>, vector<6x16xf32>
    %c4_i32_61 = arith.constant 4 : i32
    %172 = vector.broadcast %c4_i32_61 : i32 to vector<6x16xi32>
    %173 = arith.cmpi eq, %154, %172 : vector<6x16xi32>
    %cst_62 = arith.constant 0.213005543 : f32
    %174 = vector.broadcast %cst_62 : f32 to vector<6x16xf32>
    %175 = arith.select %173, %174, %171 : vector<6x16xi1>, vector<6x16xf32>
    %c5_i32_63 = arith.constant 5 : i32
    %176 = vector.broadcast %c5_i32_63 : i32 to vector<6x16xi32>
    %177 = arith.cmpi eq, %154, %176 : vector<6x16xi32>
    %cst_64 = arith.constant 0.266011715 : f32
    %178 = vector.broadcast %cst_64 : f32 to vector<6x16xf32>
    %179 = arith.select %177, %178, %175 : vector<6x16xi1>, vector<6x16xf32>
    %c6_i32_65 = arith.constant 6 : i32
    %180 = vector.broadcast %c6_i32_65 : i32 to vector<6x16xi32>
    %181 = arith.cmpi eq, %154, %180 : vector<6x16xi32>
    %cst_66 = arith.constant 0.213005543 : f32
    %182 = vector.broadcast %cst_66 : f32 to vector<6x16xf32>
    %183 = arith.select %181, %182, %179 : vector<6x16xi1>, vector<6x16xf32>
    %c7_i32_67 = arith.constant 7 : i32
    %184 = vector.broadcast %c7_i32_67 : i32 to vector<6x16xi32>
    %185 = arith.cmpi eq, %154, %184 : vector<6x16xi32>
    %cst_68 = arith.constant 0.109360687 : f32
    %186 = vector.broadcast %cst_68 : f32 to vector<6x16xf32>
    %187 = arith.select %185, %186, %183 : vector<6x16xi1>, vector<6x16xf32>
    %c8_i32_69 = arith.constant 8 : i32
    %188 = vector.broadcast %c8_i32_69 : i32 to vector<6x16xi32>
    %189 = arith.cmpi eq, %154, %188 : vector<6x16xi32>
    %cst_70 = arith.constant 0.0360007733 : f32
    %190 = vector.broadcast %cst_70 : f32 to vector<6x16xf32>
    %191 = arith.select %189, %190, %187 : vector<6x16xi1>, vector<6x16xf32>
    %c9_i32_71 = arith.constant 9 : i32
    %192 = vector.broadcast %c9_i32_71 : i32 to vector<6x16xi32>
    %193 = arith.cmpi eq, %154, %192 : vector<6x16xi32>
    %cst_72 = arith.constant 0.00759875821 : f32
    %194 = vector.broadcast %cst_72 : f32 to vector<6x16xf32>
    %195 = arith.select %193, %194, %191 : vector<6x16xi1>, vector<6x16xf32>
    %c10_i32_73 = arith.constant 10 : i32
    %196 = vector.broadcast %c10_i32_73 : i32 to vector<6x16xi32>
    %197 = arith.cmpi eq, %154, %196 : vector<6x16xi32>
    %cst_74 = arith.constant 0.00102838012 : f32
    %198 = vector.broadcast %cst_74 : f32 to vector<6x16xf32>
    %199 = arith.select %197, %198, %195 : vector<6x16xi1>, vector<6x16xf32>
    %200 = arith.truncf %199 : vector<6x16xf32> to vector<6x16xbf16>
    %cst_75 = arith.constant dense<0.000000e+00> : vector<320x6xf32>
    %201 = tpu.matmul %102, %151, %cst_75 {dimension_numbers = #tpu.dot_dimension_numbers<[1], [0], [0], [1], [0, 0, 1, 1], [], []>} : vector<320x16xbf16>, vector<16x6xbf16>, vector<320x6xf32> -> vector<320x6xf32>
    %202 = arith.truncf %201 : vector<320x6xf32> to vector<320x6xbf16>
    %203 = vector.shape_cast %202 : vector<320x6xbf16> to vector<20x16x6xbf16>
    %204 = vector.shape_cast %200 : vector<6x16xbf16> to vector<1x6x16xbf16>
    %205 = vector.broadcast %204 : vector<1x6x16xbf16> to vector<20x6x16xbf16>
    "tpu.trace_start"() <{level = 10 : i32, message = "gij,gjk->gik"}> : () -> ()
    %cst_76 = arith.constant dense<0.000000e+00> : vector<20x6x6xf32>
    %206 = tpu.matmul %205, %203, %cst_76 {dimension_numbers = #tpu.dot_dimension_numbers<[2], [1], [1], [2], [0, 0, 0, 1, 1, 2], [0], [0]>} : vector<20x6x16xbf16>, vector<20x16x6xbf16>, vector<20x6x6xf32> -> vector<20x6x6xf32>
    "tpu.trace_stop"() : () -> ()
    %207 = vector.extract_strided_slice %206 {offsets = [0, 0, 0], sizes = [4, 6, 6], strides = [1, 1, 1]} : vector<20x6x6xf32> to vector<4x6x6xf32>
    %208 = vector.extract_strided_slice %206 {offsets = [4, 0, 0], sizes = [4, 6, 6], strides = [1, 1, 1]} : vector<20x6x6xf32> to vector<4x6x6xf32>
    %209 = vector.extract_strided_slice %206 {offsets = [8, 0, 0], sizes = [4, 6, 6], strides = [1, 1, 1]} : vector<20x6x6xf32> to vector<4x6x6xf32>
    %210 = vector.extract_strided_slice %206 {offsets = [12, 0, 0], sizes = [4, 6, 6], strides = [1, 1, 1]} : vector<20x6x6xf32> to vector<4x6x6xf32>
    %211 = vector.extract_strided_slice %206 {offsets = [16, 0, 0], sizes = [4, 6, 6], strides = [1, 1, 1]} : vector<20x6x6xf32> to vector<4x6x6xf32>
    %212 = arith.mulf %207, %207 : vector<4x6x6xf32>
    %213 = arith.mulf %208, %208 : vector<4x6x6xf32>
    %214 = arith.mulf %207, %208 : vector<4x6x6xf32>
    %215 = arith.subf %209, %212 : vector<4x6x6xf32>
    %216 = arith.subf %210, %213 : vector<4x6x6xf32>
    %217 = arith.subf %211, %214 : vector<4x6x6xf32>
    %218 = arith.addf %215, %216 : vector<4x6x6xf32>
    %cst_77 = arith.constant 0.000000e+00 : f32
    %219 = vector.broadcast %cst_77 : f32 to vector<4x6x6xf32>
    %220 = arith.maximumf %218, %219 : vector<4x6x6xf32>
    %cst_78 = arith.constant 8.99999984E-4 : f32
    %221 = vector.broadcast %cst_78 : f32 to vector<4x6x6xf32>
    %222 = arith.addf %220, %221 : vector<4x6x6xf32>
    %cst_79 = arith.constant 2.000000e+00 : f32
    %223 = vector.broadcast %cst_79 : f32 to vector<4x6x6xf32>
    %224 = arith.mulf %223, %217 : vector<4x6x6xf32>
    %cst_80 = arith.constant 8.99999984E-4 : f32
    %225 = vector.broadcast %cst_80 : f32 to vector<4x6x6xf32>
    %226 = arith.addf %224, %225 : vector<4x6x6xf32>
    %227 = tpu.reciprocal %222 {approx = true} : vector<4x6x6xf32> -> vector<4x6x6xf32>
    %228 = arith.mulf %222, %227 : vector<4x6x6xf32>
    %cst_81 = arith.constant 2.000000e+00 : f32
    %229 = vector.broadcast %cst_81 : f32 to vector<4x6x6xf32>
    %230 = arith.subf %229, %228 : vector<4x6x6xf32>
    %231 = arith.mulf %227, %230 : vector<4x6x6xf32>
    %232 = arith.mulf %226, %231 : vector<4x6x6xf32>
    %cst_82 = arith.constant 2.000000e+00 : f32
    %233 = vector.broadcast %cst_82 : f32 to vector<4x6x6xf32>
    %234 = arith.mulf %233, %214 : vector<4x6x6xf32>
    %cst_83 = arith.constant 9.99999974E-5 : f32
    %235 = vector.broadcast %cst_83 : f32 to vector<4x6x6xf32>
    %236 = arith.addf %234, %235 : vector<4x6x6xf32>
    %237 = arith.addf %212, %213 : vector<4x6x6xf32>
    %cst_84 = arith.constant 9.99999974E-5 : f32
    %238 = vector.broadcast %cst_84 : f32 to vector<4x6x6xf32>
    %239 = arith.addf %237, %238 : vector<4x6x6xf32>
    %240 = tpu.reciprocal %239 {approx = true} : vector<4x6x6xf32> -> vector<4x6x6xf32>
    %241 = arith.mulf %239, %240 : vector<4x6x6xf32>
    %cst_85 = arith.constant 2.000000e+00 : f32
    %242 = vector.broadcast %cst_85 : f32 to vector<4x6x6xf32>
    %243 = arith.subf %242, %241 : vector<4x6x6xf32>
    %244 = arith.mulf %240, %243 : vector<4x6x6xf32>
    %245 = arith.mulf %236, %244 : vector<4x6x6xf32>
    %246 = arith.mulf %245, %232 : vector<4x6x6xf32>
    %247 = vector.shape_cast %246 : vector<4x6x6xf32> to vector<1x4x6x6xf32>
    %cst_86 = arith.constant dense<0.000000e+00> : vector<1xf32>
    %248 = vector.multi_reduction <add>, %247, %cst_86 [1, 2, 3] : vector<1x4x6x6xf32> to vector<1xf32>
    %249 = vector.shape_cast %248 : vector<1xf32> to vector<1x1x1x1xf32>
    %250 = vector.extract %249[0, 0, 0, 0] : f32 from vector<1x1x1x1xf32>
    %251 = vector.broadcast %250 : f32 to vector<1x8x128xf32>
    %c0_87 = arith.constant 0 : index
    %c0_88 = arith.constant 0 : index
    %c0_89 = arith.constant 0 : index
    %252 = vector.load %arg3[%c0_87, %c0_88, %c0_89] : memref<1x8x128xf32, #tpu.memory_space<vmem>>, vector<1x8x128xf32>
    tpu.vector_store %arg3[%c0_87, %c0_88, %c0_89], %251 {strides = array<i32>} : memref<1x8x128xf32, #tpu.memory_space<vmem>>, vector<1x8x128xf32>,
    return
  }
  func.func @transform_0(%arg0: i32) -> (i32, i32, i32) {
    %c0_i32 = arith.constant 0 : i32
    %c0_i32_0 = arith.constant 0 : i32
    %c0_i32_1 = arith.constant 0 : i32
    return %arg0, %c0_i32, %c0_i32_0 : i32, i32, i32
  }
  func.func @transform_1(%arg0: i32) -> (i32, i32, i32) {
    %c0_i32 = arith.constant 0 : i32
    %c0_i32_0 = arith.constant 0 : i32
    %c0_i32_1 = arith.constant 0 : i32
    return %arg0, %c0_i32, %c0_i32_0 : i32, i32, i32
  }
  func.func @transform_2(%arg0: i32) -> (i32, i32, i32) {
    %c0_i32 = arith.constant 0 : i32
    %c0_i32_0 = arith.constant 0 : i32
    %c0_i32_1 = arith.constant 0 : i32
    return %arg0, %c0_i32, %c0_i32_0 : i32, i32, i32
  }
}

</mosaic_0001>

<llo_original>
// kernel: tpu_custom_call.1
$region0: #{tpu_custom_call.1}
  #allocation0 [shape = 'u32[]', space=smem, size = 0x4, offset = 0x4, fixed_abs, tag = 'smem constant byte address 0x4 - core index']
  #allocation1 [shape = 'u32[144,128]{1,0:T(1,128)}', space=vmem, size = 0x12000, scoped, tag = 'internal scratch']
  %s0 = inlined_call_operand.hbm [shape: bf16[8,16,16], index: 0, kind: input, shape index: {}]
  %s1 = inlined_call_operand.hbm [shape: bf16[8,16,16], index: 1, kind: input, shape index: {}]
  %s2 = inlined_call_operand.hbm [shape: f32[2,8,128], index: 2, kind: output, shape index: {}]
  %s3 = sld [smem:[#allocation0]]
  $region49: #{tpu_custom_call.1} parent=0
    _
  %s5 = ssub.s32 1, %s3
  %s6 = scalar_select 0, %s5, %s3
  $region1: #{tpu_custom_call.1} parent=0
    #allocation2 [shape = 'u8[32768]{0}', space=vmem, size = 0x8000, scoped, tag = 'input window, operand 0']
    #allocation3 [shape = 's32[2]{0}', space=sflag, size = 0x8, scoped, tag = 'scoped memory for tpu_custom_call.1']
    #allocation4 [shape = 's32[2]{0}', space=sflag, size = 0x8, scoped, tag = 'scoped memory for tpu_custom_call.1']
    #allocation5 [shape = 'u8[32768]{0}', space=vmem, size = 0x8000, scoped, tag = 'input window, operand 1']
    #allocation6 [shape = 's32[2]{0}', space=sflag, size = 0x8, scoped, tag = 'scoped memory for tpu_custom_call.1']
    #allocation7 [shape = 'u8[8192]{0}', space=vmem, size = 0x2000, scoped, tag = 'output window, operand 0']
    %7 = vsyncpa [#allocation3], 0
    %s8 = scalar_lea.sflag [#allocation3], 1
    %9 = vsyncpa %s8, 0
    %10 = vsyncpa [#allocation6], 0
    %s11 = scalar_lea.sflag [#allocation6], 1
    %12 = vsyncpa %s11, 0
    %13 = vsyncpa [#allocation4], 0
    %s14 = scalar_lea.sflag [#allocation4], 1
    %15 = vsyncpa %s14, 0
    loop: start=0, step=1, limit=4
    $region2: #{tpu_custom_call.1} parent=1 // loop_pre_header
      _
    $region3: #{tpu_custom_call.1} parent=1 // loop_header
      %s17 = sphi 0, %s21
      %p18 = scmp.ge.s32.totalorder %s17, 4
      %s27 = sphi 0, %s29
      %s30 = sphi 0, %s27
      %s31 = sphi 0, %s30
      %s47 = sphi 0, %s31
      %s53 = sphi 0, %s55
      %s56 = sphi 0, %s53
      %s57 = sphi 0, %s56
      %s73 = sphi 0, %s57
      %s79 = sphi 0, %s81
      %s82 = sphi 0, %s79
      %s83 = sphi 0, %s82
      %s99 = sphi 0, %s83
    $region4: #{tpu_custom_call.1} parent=1 // loop_header_branch
      %20 = sbr.rel (%p18) target = $region8
    $region5: #{tpu_custom_call.1} parent=1 // loop_body
      %s22 = ssub.s32 %s17, 1
      %s23 = ssub.s32 %s17, 2
      %s24 = sadd.s32 %s17, 1
      %s25 = ssub.s32 %s17, %s24
      %p26 = scmp.eq.s32.totalorder %s25, 0
      %s28 = sadd.s32 %s27, 1
      %s29 = scalar_select %p26, %s27, %s28
      %p32 = pneg %p26
      %p33 = scmp.eq.s32.totalorder %s17, 1
      %p34 = por %p32, %p33
      %p35 = scmp.ne.s32.totalorder %s27, %s30
      %p36 = scmp.eq.s32.totalorder %s17, 0
      %p37 = por %p35, %p36
      %p38 = scmp.ne.s32.totalorder %s27, %s30
      %p39 = scmp.eq.s32.totalorder %s22, 1
      %p40 = por %p38, %p39
      %p41 = scmp.ne.s32.totalorder %s30, %s31
      %p42 = scmp.eq.s32.totalorder %s22, 0
      %p43 = por %p41, %p42
      %p44 = scmp.ne.s32.totalorder %s30, %s31
      %p45 = scmp.eq.s32.totalorder %s23, 1
      %p46 = por %p44, %p45
      %p48 = scmp.ne.s32.totalorder %s31, %s47
      %p49 = scmp.eq.s32.totalorder %s23, 0
      %p50 = por %p48, %p49
      %s51 = ssub.s32 %s17, %s24
      %p52 = scmp.eq.s32.totalorder %s51, 0
      %s54 = sadd.s32 %s53, 1
      %s55 = scalar_select %p52, %s53, %s54
      %p58 = pneg %p52
      %p59 = scmp.eq.s32.totalorder %s17, 1
      %p60 = por %p58, %p59
      %p61 = scmp.ne.s32.totalorder %s53, %s56
      %p62 = scmp.eq.s32.totalorder %s17, 0
      %p63 = por %p61, %p62
      %p64 = scmp.ne.s32.totalorder %s53, %s56
      %p65 = scmp.eq.s32.totalorder %s22, 1
      %p66 = por %p64, %p65
      %p67 = scmp.ne.s32.totalorder %s56, %s57
      %p68 = scmp.eq.s32.totalorder %s22, 0
      %p69 = por %p67, %p68
      %p70 = scmp.ne.s32.totalorder %s56, %s57
      %p71 = scmp.eq.s32.totalorder %s23, 1
      %p72 = por %p70, %p71
      %p74 = scmp.ne.s32.totalorder %s57, %s73
      %p75 = scmp.eq.s32.totalorder %s23, 0
      %p76 = por %p74, %p75
      %s77 = ssub.s32 %s17, %s24
      %p78 = scmp.eq.s32.totalorder %s77, 0
      %s80 = sadd.s32 %s79, 1
      %s81 = scalar_select %p78, %s79, %s80
      %p84 = pneg %p78
      %p85 = scmp.eq.s32.totalorder %s17, 1
      %p86 = por %p84, %p85
      %p87 = scmp.ne.s32.totalorder %s79, %s82
      %p88 = scmp.eq.s32.totalorder %s17, 0
      %p89 = por %p87, %p88
      %p90 = scmp.ne.s32.totalorder %s79, %s82
      %p91 = scmp.eq.s32.totalorder %s22, 1
      %p92 = por %p90, %p91
      %p93 = scmp.ne.s32.totalorder %s82, %s83
      %p94 = scmp.eq.s32.totalorder %s22, 0
      %p95 = por %p93, %p94
      %p96 = scmp.ne.s32.totalorder %s82, %s83
      %p97 = scmp.eq.s32.totalorder %s23, 1
      %p98 = por %p96, %p97
      %p100 = scmp.ne.s32.totalorder %s83, %s99
      %p101 = scmp.eq.s32.totalorder %s23, 0
      %p102 = por %p100, %p101
      %p103 = scmp.le.s32.totalorder 1, %s17
      %p104 = scmp.lt.s32.totalorder %s17, 3
      %p105 = pnand %p103, %p104
      %p106 = pneg %p105
      // Predicated region
      $region9: #{tpu_custom_call.1} parent=5 // pred_check
        _
      $region10: #{tpu_custom_call.1} parent=5 // pred_check_branch
        %108 = sbr.rel (%p105) target = $region12
      $region11: #{tpu_custom_call.1} parent=5 // pred_region
        %s109 = ssub.s32 %s17, 1
      $region12: #{tpu_custom_call.1} parent=5 // pred_fallthru
        _
      %p110 = scmp.lt.s32.totalorder %s17, 2
      // Predicated region
      $region13: #{tpu_custom_call.1} parent=5 // pred_check
        %p111 = pneg %p110
      $region14: #{tpu_custom_call.1} parent=5 // pred_check_branch
        %113 = sbr.rel (%p111) target = $region16
      $region15: #{tpu_custom_call.1} parent=5 // pred_region
        // Predicated region
        $region17: #{tpu_custom_call.1} parent=15 // pred_check
          %p114 = pneg %p37
        $region18: #{tpu_custom_call.1} parent=15 // pred_check_branch
          %116 = sbr.rel (%p114) target = $region20
        $region19: #{tpu_custom_call.1} parent=15 // pred_region
          %s117 = sand.u32 %s27, 1
          %s118 = scalar_lea.sflag [#allocation3], %s117
          %s119 = sand.u32 %s27, 1
          %s120 = smul.addr %s119, 32
          %s121 = scalar_lea.vmem [#allocation2], %s120
          %s122 = smul.u32 4, %s17
          %s124 = ssub.s32 512, 512
          %125 = vsyncadd %s118, %s124
          %s126 = smul.addr %s122, 2
          %s127 = smul.addr %s126, 64
          %s128 = scalar_lea.hbm %s0, %s127
          %s129 = sshll.u32 %s121, 4
          %s130 = int_to_ptr.vmem [resolvable:$true] %s129
          %135 = dma.hbm_to_vmem [thread:$0]  %s128, 512, %s130, %s118, 64, 64, 4
        $region20: #{tpu_custom_call.1} parent=15 // pred_fallthru
          _
        // Predicated region
        $region21: #{tpu_custom_call.1} parent=15 // pred_check
          %p136 = pneg %p63
        $region22: #{tpu_custom_call.1} parent=15 // pred_check_branch
          %138 = sbr.rel (%p136) target = $region24
        $region23: #{tpu_custom_call.1} parent=15 // pred_region
          %s139 = sand.u32 %s53, 1
          %s140 = scalar_lea.sflag [#allocation6], %s139
          %s141 = sand.u32 %s53, 1
          %s142 = smul.addr %s141, 32
          %s143 = scalar_lea.vmem [#allocation5], %s142
          %s144 = smul.u32 4, %s17
          %s146 = ssub.s32 512, 512
          %147 = vsyncadd %s140, %s146
          %s148 = smul.addr %s144, 2
          %s149 = smul.addr %s148, 64
          %s150 = scalar_lea.hbm %s1, %s149
          %s151 = sshll.u32 %s143, 4
          %s152 = int_to_ptr.vmem [resolvable:$true] %s151
          %157 = dma.hbm_to_vmem [thread:$0]  %s150, 512, %s152, %s140, 64, 64, 4
        $region24: #{tpu_custom_call.1} parent=15 // pred_fallthru
          _
      $region16: #{tpu_custom_call.1} parent=5 // pred_fallthru
        _
      %p158 = scmp.le.s32.totalorder 1, %s17
      %p159 = scmp.lt.s32.totalorder %s17, 3
      %p160 = pnand %p158, %p159
      %p161 = pneg %p160
      // Predicated region
      $region25: #{tpu_custom_call.1} parent=5 // pred_check
        _
      $region26: #{tpu_custom_call.1} parent=5 // pred_check_branch
        %163 = sbr.rel (%p160) target = $region28
      $region27: #{tpu_custom_call.1} parent=5 // pred_region
        %s164 = ssub.s32 %s17, 1
        %s165 = sand.u32 %s30, 1
        %s166 = scalar_lea.sflag [#allocation3], %s165
        %s167 = sand.u32 %s30, 1
        %s168 = smul.addr %s167, 32
        %s169 = scalar_lea.vmem [#allocation2], %s168
        // Predicated region
        $region29: #{tpu_custom_call.1} parent=27 // pred_check
          %p170 = pneg %p43
        $region30: #{tpu_custom_call.1} parent=27 // pred_check_branch
          %172 = sbr.rel (%p170) target = $region32
        $region31: #{tpu_custom_call.1} parent=27 // pred_region
          %173 = dma.done %s166, 512
        $region32: #{tpu_custom_call.1} parent=27 // pred_fallthru
          _
        %s174 = sand.u32 %s56, 1
        %s175 = scalar_lea.sflag [#allocation6], %s174
        %s176 = sand.u32 %s56, 1
        %s177 = smul.addr %s176, 32
        %s178 = scalar_lea.vmem [#allocation5], %s177
        // Predicated region
        $region33: #{tpu_custom_call.1} parent=27 // pred_check
          %p179 = pneg %p69
        $region34: #{tpu_custom_call.1} parent=27 // pred_check_branch
          %181 = sbr.rel (%p179) target = $region36
        $region35: #{tpu_custom_call.1} parent=27 // pred_region
          %182 = dma.done %s175, 512
        $region36: #{tpu_custom_call.1} parent=27 // pred_fallthru
          _
        %s183 = sand.u32 %s30, 1
        %s184 = scalar_lea.sflag [#allocation3], %s183
        %s185 = sand.u32 %s30, 1
        %s186 = smul.addr %s185, 32
        %s187 = scalar_lea.vmem [#allocation2], %s186
        %p188 = pneg %p43
        %p189 = pneg %p40
        %s190 = sand.u32 %s56, 1
        %s191 = scalar_lea.sflag [#allocation6], %s190
        %s192 = sand.u32 %s56, 1
        %s193 = smul.addr %s192, 32
        %s194 = scalar_lea.vmem [#allocation5], %s193
        %p195 = pneg %p69
        %p196 = pneg %p66
        %p197 = pneg %p95
        %p198 = pneg %p92
        %s199 = sand.u32 %s82, 1
        %s200 = scalar_lea.sflag [#allocation4], %s199
        %s201 = sand.u32 %s82, 1
        %s202 = smul.addr %s201, 8
        %s203 = scalar_lea.vmem [#allocation7], %s202
        %s204 = smul.u32 4, %s22
        %s205 = smul.u32 4, %s22
        %v207 = vld [vmem:[%s169] sm:$0xf]
        %v208 = vld [vmem:[%s169 + $0x4] sm:$0xf]
        %v209 = vld [vmem:[%s169 + $0x8] sm:$0xf]
        %v210 = vld [vmem:[%s169 + $0xc] sm:$0xf]
        %v211 = vld [vmem:[%s169 + $0x10] sm:$0xf]
        %v212 = vld [vmem:[%s169 + $0x14] sm:$0xf]
        %v213 = vld [vmem:[%s169 + $0x18] sm:$0xf]
        %v214 = vld [vmem:[%s169 + $0x1c] sm:$0xf]
        %v215 = vunpack.c.l.bf16 %v207
        %v216 = vunpack.c.l.bf16 %v208
        %v217 = vunpack.c.l.bf16 %v209
        %v218 = vunpack.c.l.bf16 %v210
        %v219 = vunpack.c.l.bf16 %v211
        %v220 = vunpack.c.l.bf16 %v212
        %v221 = vunpack.c.l.bf16 %v213
        %v222 = vunpack.c.l.bf16 %v214
        %vm223 = vcmp.gt.f32.partialorder %v215, 0.0
        %vm224 = vcmp.gt.f32.partialorder %v216, 0.0
        %vm225 = vcmp.gt.f32.partialorder %v217, 0.0
        %vm226 = vcmp.gt.f32.partialorder %v218, 0.0
        %vm227 = vcmp.gt.f32.partialorder %v219, 0.0
        %vm228 = vcmp.gt.f32.partialorder %v220, 0.0
        %vm229 = vcmp.gt.f32.partialorder %v221, 0.0
        %vm230 = vcmp.gt.f32.partialorder %v222, 0.0
        %v231 = vsel %vm223, %v215, 1.0
        %v232 = vsel %vm224, %v216, 1.0
        %v233 = vsel %vm225, %v217, 1.0
        %v234 = vsel %vm226, %v218, 1.0
        %v235 = vsel %vm227, %v219, 1.0
        %v236 = vsel %vm228, %v220, 1.0
        %v237 = vsel %vm229, %v221, 1.0
        %v238 = vsel %vm230, %v222, 1.0
        %v239 = vlog2.pop %v231
        %v240 = vmul.f32 %v239, 0.6931472
        %v241 = vlog2.pop %v232
        %v242 = vmul.f32 %v241, 0.6931472
        %v243 = vlog2.pop %v233
        %v244 = vmul.f32 %v243, 0.6931472
        %v245 = vlog2.pop %v234
        %v246 = vmul.f32 %v245, 0.6931472
        %v247 = vlog2.pop %v235
        %v248 = vmul.f32 %v247, 0.6931472
        %v249 = vlog2.pop %v236
        %v250 = vmul.f32 %v249, 0.6931472
        %v251 = vlog2.pop %v237
        %v252 = vmul.f32 %v251, 0.6931472
        %v253 = vlog2.pop %v238
        %v254 = vmul.f32 %v253, 0.6931472
        %v255 = vmul.f32 %v240, 2.2
        %v256 = vmul.f32 %v242, 2.2
        %v257 = vmul.f32 %v244, 2.2
        %v258 = vmul.f32 %v246, 2.2
        %v259 = vmul.f32 %v248, 2.2
        %v260 = vmul.f32 %v250, 2.2
        %v261 = vmul.f32 %v252, 2.2
        %v262 = vmul.f32 %v254, 2.2
        %v263 = vmul.f32 %v255, 1.442695
        %v264 = vpow.pop %v263
        %v265 = vmul.f32 %v256, 1.442695
        %v266 = vpow.pop %v265
        %v267 = vmul.f32 %v257, 1.442695
        %v268 = vpow.pop %v267
        %v269 = vmul.f32 %v258, 1.442695
        %v270 = vpow.pop %v269
        %v271 = vmul.f32 %v259, 1.442695
        %v272 = vpow.pop %v271
        %v273 = vmul.f32 %v260, 1.442695
        %v274 = vpow.pop %v273
        %v275 = vmul.f32 %v261, 1.442695
        %v276 = vpow.pop %v275
        %v277 = vmul.f32 %v262, 1.442695
        %v278 = vpow.pop %v277
        %v279 = vsel %vm223, %v264, 0.0
        %v280 = vsel %vm224, %v266, 0.0
        %v281 = vsel %vm225, %v268, 0.0
        %v282 = vsel %vm226, %v270, 0.0
        %v283 = vsel %vm227, %v272, 0.0
        %v284 = vsel %vm228, %v274, 0.0
        %v285 = vsel %vm229, %v276, 0.0
        %v286 = vsel %vm230, %v278, 0.0
        %v287 = vmul.f32 %v279, 2.51
        %v288 = vmul.f32 %v280, 2.51
        %v289 = vmul.f32 %v281, 2.51
        %v290 = vmul.f32 %v282, 2.51
        %v291 = vmul.f32 %v283, 2.51
        %v292 = vmul.f32 %v284, 2.51
        %v293 = vmul.f32 %v285, 2.51
        %v294 = vmul.f32 %v286, 2.51
        %v295 = vadd.f32 %v287, 0.03
        %v296 = vadd.f32 %v288, 0.03
        %v297 = vadd.f32 %v289, 0.03
        %v298 = vadd.f32 %v290, 0.03
        %v299 = vadd.f32 %v291, 0.03
        %v300 = vadd.f32 %v292, 0.03
        %v301 = vadd.f32 %v293, 0.03
        %v302 = vadd.f32 %v294, 0.03
        %v303 = vmul.f32 %v279, %v295
        %v304 = vmul.f32 %v280, %v296
        %v305 = vmul.f32 %v281, %v297
        %v306 = vmul.f32 %v282, %v298
        %v307 = vmul.f32 %v283, %v299
        %v308 = vmul.f32 %v284, %v300
        %v309 = vmul.f32 %v285, %v301
        %v310 = vmul.f32 %v286, %v302
        %v311 = vmul.f32 %v279, 2.43
        %v312 = vmul.f32 %v280, 2.43
        %v313 = vmul.f32 %v281, 2.43
        %v314 = vmul.f32 %v282, 2.43
        %v315 = vmul.f32 %v283, 2.43
        %v316 = vmul.f32 %v284, 2.43
        %v317 = vmul.f32 %v285, 2.43
        %v318 = vmul.f32 %v286, 2.43
        %v319 = vadd.f32 %v311, 0.59
        %v320 = vadd.f32 %v312, 0.59
        %v321 = vadd.f32 %v313, 0.59
        %v322 = vadd.f32 %v314, 0.59
        %v323 = vadd.f32 %v315, 0.59
        %v324 = vadd.f32 %v316, 0.59
        %v325 = vadd.f32 %v317, 0.59
        %v326 = vadd.f32 %v318, 0.59
        %v327 = vmul.f32 %v279, %v319
        %v328 = vmul.f32 %v280, %v320
        %v329 = vmul.f32 %v281, %v321
        %v330 = vmul.f32 %v282, %v322
        %v331 = vmul.f32 %v283, %v323
        %v332 = vmul.f32 %v284, %v324
        %v333 = vmul.f32 %v285, %v325
        %v334 = vmul.f32 %v286, %v326
        %v335 = vadd.f32 %v327, 0.14
        %v336 = vadd.f32 %v328, 0.14
        %v337 = vadd.f32 %v329, 0.14
        %v338 = vadd.f32 %v330, 0.14
        %v339 = vadd.f32 %v331, 0.14
        %v340 = vadd.f32 %v332, 0.14
        %v341 = vadd.f32 %v333, 0.14
        %v342 = vadd.f32 %v334, 0.14
        %v343 = vrcp.pop %v335
        %v344 = vrcp.pop %v336
        %v345 = vrcp.pop %v337
        %v346 = vrcp.pop %v338
        %v347 = vrcp.pop %v339
        %v348 = vrcp.pop %v340
        %v349 = vrcp.pop %v341
        %v350 = vrcp.pop %v342
        %v351 = vmul.f32 %v335, %v343
        %v352 = vmul.f32 %v336, %v344
        %v353 = vmul.f32 %v337, %v345
        %v354 = vmul.f32 %v338, %v346
        %v355 = vmul.f32 %v339, %v347
        %v356 = vmul.f32 %v340, %v348
        %v357 = vmul.f32 %v341, %v349
        %v358 = vmul.f32 %v342, %v350
        %v359 = vsub.f32 2.0, %v351
        %v360 = vsub.f32 2.0, %v352
        %v361 = vsub.f32 2.0, %v353
        %v362 = vsub.f32 2.0, %v354
        %v363 = vsub.f32 2.0, %v355
        %v364 = vsub.f32 2.0, %v356
        %v365 = vsub.f32 2.0, %v357
        %v366 = vsub.f32 2.0, %v358
        %v367 = vmul.f32 %v343, %v359
        %v368 = vmul.f32 %v344, %v360
        %v369 = vmul.f32 %v345, %v361
        %v370 = vmul.f32 %v346, %v362
        %v371 = vmul.f32 %v347, %v363
        %v372 = vmul.f32 %v348, %v364
        %v373 = vmul.f32 %v349, %v365
        %v374 = vmul.f32 %v350, %v366
        %v375 = vmul.f32 %v303, %v367
        %v376 = vmul.f32 %v304, %v368
        %v377 = vmul.f32 %v305, %v369
        %v378 = vmul.f32 %v306, %v370
        %v379 = vmul.f32 %v307, %v371
        %v380 = vmul.f32 %v308, %v372
        %v381 = vmul.f32 %v309, %v373
        %v382 = vmul.f32 %v310, %v374
        %v383 = vmax.f32 %v375, 0.0
        %v384 = vmax.f32 %v376, 0.0
        %v385 = vmax.f32 %v377, 0.0
        %v386 = vmax.f32 %v378, 0.0
        %v387 = vmax.f32 %v379, 0.0
        %v388 = vmax.f32 %v380, 0.0
        %v389 = vmax.f32 %v381, 0.0
        %v390 = vmax.f32 %v382, 0.0
        %v391 = vmin.f32 %v383, 1.0
        %v392 = vmin.f32 %v384, 1.0
        %v393 = vmin.f32 %v385, 1.0
        %v394 = vmin.f32 %v386, 1.0
        %v395 = vmin.f32 %v387, 1.0
        %v396 = vmin.f32 %v388, 1.0
        %v397 = vmin.f32 %v389, 1.0
        %v398 = vmin.f32 %v390, 1.0
        %vm399 = vcmp.gt.f32.partialorder %v391, 0.0
        %vm400 = vcmp.gt.f32.partialorder %v392, 0.0
        %vm401 = vcmp.gt.f32.partialorder %v393, 0.0
        %vm402 = vcmp.gt.f32.partialorder %v394, 0.0
        %vm403 = vcmp.gt.f32.partialorder %v395, 0.0
        %vm404 = vcmp.gt.f32.partialorder %v396, 0.0
        %vm405 = vcmp.gt.f32.partialorder %v397, 0.0
        %vm406 = vcmp.gt.f32.partialorder %v398, 0.0
        %v407 = vsel %vm399, %v391, 1.0
        %v408 = vsel %vm400, %v392, 1.0
        %v409 = vsel %vm401, %v393, 1.0
        %v410 = vsel %vm402, %v394, 1.0
        %v411 = vsel %vm403, %v395, 1.0
        %v412 = vsel %vm404, %v396, 1.0
        %v413 = vsel %vm405, %v397, 1.0
        %v414 = vsel %vm406, %v398, 1.0
        %v415 = vlog2.pop %v407
        %v416 = vmul.f32 %v415, 0.6931472
        %v417 = vlog2.pop %v408
        %v418 = vmul.f32 %v417, 0.6931472
        %v419 = vlog2.pop %v409
        %v420 = vmul.f32 %v419, 0.6931472
        %v421 = vlog2.pop %v410
        %v422 = vmul.f32 %v421, 0.6931472
        %v423 = vlog2.pop %v411
        %v424 = vmul.f32 %v423, 0.6931472
        %v425 = vlog2.pop %v412
        %v426 = vmul.f32 %v425, 0.6931472
        %v427 = vlog2.pop %v413
        %v428 = vmul.f32 %v427, 0.6931472
        %v429 = vlog2.pop %v414
        %v430 = vmul.f32 %v429, 0.6931472
        %v431 = vmul.f32 %v416, 0.45454547
        %v432 = vmul.f32 %v418, 0.45454547
        %v433 = vmul.f32 %v420, 0.45454547
        %v434 = vmul.f32 %v422, 0.45454547
        %v435 = vmul.f32 %v424, 0.45454547
        %v436 = vmul.f32 %v426, 0.45454547
        %v437 = vmul.f32 %v428, 0.45454547
        %v438 = vmul.f32 %v430, 0.45454547
        %v439 = vmul.f32 %v431, 1.442695
        %v440 = vpow.pop %v439
        %v441 = vmul.f32 %v432, 1.442695
        %v442 = vpow.pop %v441
        %v443 = vmul.f32 %v433, 1.442695
        %v444 = vpow.pop %v443
        %v445 = vmul.f32 %v434, 1.442695
        %v446 = vpow.pop %v445
        %v447 = vmul.f32 %v435, 1.442695
        %v448 = vpow.pop %v447
        %v449 = vmul.f32 %v436, 1.442695
        %v450 = vpow.pop %v449
        %v451 = vmul.f32 %v437, 1.442695
        %v452 = vpow.pop %v451
        %v453 = vmul.f32 %v438, 1.442695
        %v454 = vpow.pop %v453
        %v455 = vsel %vm399, %v440, 0.0
        %v456 = vsel %vm400, %v442, 0.0
        %v457 = vsel %vm401, %v444, 0.0
        %v458 = vsel %vm402, %v446, 0.0
        %v459 = vsel %vm403, %v448, 0.0
        %v460 = vsel %vm404, %v450, 0.0
        %v461 = vsel %vm405, %v452, 0.0
        %v462 = vsel %vm406, %v454, 0.0
        %v463 = vld [vmem:[%s178] sm:$0xf]
        %v464 = vld [vmem:[%s178 + $0x4] sm:$0xf]
        %v465 = vld [vmem:[%s178 + $0x8] sm:$0xf]
        %v466 = vld [vmem:[%s178 + $0xc] sm:$0xf]
        %v467 = vld [vmem:[%s178 + $0x10] sm:$0xf]
        %v468 = vld [vmem:[%s178 + $0x14] sm:$0xf]
        %v469 = vld [vmem:[%s178 + $0x18] sm:$0xf]
        %v470 = vld [vmem:[%s178 + $0x1c] sm:$0xf]
        %v471 = vunpack.c.l.bf16 %v463
        %v472 = vunpack.c.l.bf16 %v464
        %v473 = vunpack.c.l.bf16 %v465
        %v474 = vunpack.c.l.bf16 %v466
        %v475 = vunpack.c.l.bf16 %v467
        %v476 = vunpack.c.l.bf16 %v468
        %v477 = vunpack.c.l.bf16 %v469
        %v478 = vunpack.c.l.bf16 %v470
        %vm479 = vcmp.gt.f32.partialorder %v471, 0.0
        %vm480 = vcmp.gt.f32.partialorder %v472, 0.0
        %vm481 = vcmp.gt.f32.partialorder %v473, 0.0
        %vm482 = vcmp.gt.f32.partialorder %v474, 0.0
        %vm483 = vcmp.gt.f32.partialorder %v475, 0.0
        %vm484 = vcmp.gt.f32.partialorder %v476, 0.0
        %vm485 = vcmp.gt.f32.partialorder %v477, 0.0
        %vm486 = vcmp.gt.f32.partialorder %v478, 0.0
        %v487 = vsel %vm479, %v471, 1.0
        %v488 = vsel %vm480, %v472, 1.0
        %v489 = vsel %vm481, %v473, 1.0
        %v490 = vsel %vm482, %v474, 1.0
        %v491 = vsel %vm483, %v475, 1.0
        %v492 = vsel %vm484, %v476, 1.0
        %v493 = vsel %vm485, %v477, 1.0
        %v494 = vsel %vm486, %v478, 1.0
        %v495 = vlog2.pop %v487
        %v496 = vmul.f32 %v495, 0.6931472
        %v497 = vlog2.pop %v488
        %v498 = vmul.f32 %v497, 0.6931472
        %v499 = vlog2.pop %v489
        %v500 = vmul.f32 %v499, 0.6931472
        %v501 = vlog2.pop %v490
        %v502 = vmul.f32 %v501, 0.6931472
        %v503 = vlog2.pop %v491
        %v504 = vmul.f32 %v503, 0.6931472
        %v505 = vlog2.pop %v492
        %v506 = vmul.f32 %v505, 0.6931472
        %v507 = vlog2.pop %v493
        %v508 = vmul.f32 %v507, 0.6931472
        %v509 = vlog2.pop %v494
        %v510 = vmul.f32 %v509, 0.6931472
        %v511 = vmul.f32 %v496, 2.2
        %v512 = vmul.f32 %v498, 2.2
        %v513 = vmul.f32 %v500, 2.2
        %v514 = vmul.f32 %v502, 2.2
        %v515 = vmul.f32 %v504, 2.2
        %v516 = vmul.f32 %v506, 2.2
        %v517 = vmul.f32 %v508, 2.2
        %v518 = vmul.f32 %v510, 2.2
        %v519 = vmul.f32 %v511, 1.442695
        %v520 = vpow.pop %v519
        %v521 = vmul.f32 %v512, 1.442695
        %v522 = vpow.pop %v521
        %v523 = vmul.f32 %v513, 1.442695
        %v524 = vpow.pop %v523
        %v525 = vmul.f32 %v514, 1.442695
        %v526 = vpow.pop %v525
        %v527 = vmul.f32 %v515, 1.442695
        %v528 = vpow.pop %v527
        %v529 = vmul.f32 %v516, 1.442695
        %v530 = vpow.pop %v529
        %v531 = vmul.f32 %v517, 1.442695
        %v532 = vpow.pop %v531
        %v533 = vmul.f32 %v518, 1.442695
        %v534 = vpow.pop %v533
        %v535 = vsel %vm479, %v520, 0.0
        %v536 = vsel %vm480, %v522, 0.0
        %v537 = vsel %vm481, %v524, 0.0
        %v538 = vsel %vm482, %v526, 0.0
        %v539 = vsel %vm483, %v528, 0.0
        %v540 = vsel %vm484, %v530, 0.0
        %v541 = vsel %vm485, %v532, 0.0
        %v542 = vsel %vm486, %v534, 0.0
        %v543 = vmul.f32 %v535, 2.51
        %v544 = vmul.f32 %v536, 2.51
        %v545 = vmul.f32 %v537, 2.51
        %v546 = vmul.f32 %v538, 2.51
        %v547 = vmul.f32 %v539, 2.51
        %v548 = vmul.f32 %v540, 2.51
        %v549 = vmul.f32 %v541, 2.51
        %v550 = vmul.f32 %v542, 2.51
        %v551 = vadd.f32 %v543, 0.03
        %v552 = vadd.f32 %v544, 0.03
        %v553 = vadd.f32 %v545, 0.03
        %v554 = vadd.f32 %v546, 0.03
        %v555 = vadd.f32 %v547, 0.03
        %v556 = vadd.f32 %v548, 0.03
        %v557 = vadd.f32 %v549, 0.03
        %v558 = vadd.f32 %v550, 0.03
        %v559 = vmul.f32 %v535, %v551
        %v560 = vmul.f32 %v536, %v552
        %v561 = vmul.f32 %v537, %v553
        %v562 = vmul.f32 %v538, %v554
        %v563 = vmul.f32 %v539, %v555
        %v564 = vmul.f32 %v540, %v556
        %v565 = vmul.f32 %v541, %v557
        %v566 = vmul.f32 %v542, %v558
        %v567 = vmul.f32 %v535, 2.43
        %v568 = vmul.f32 %v536, 2.43
        %v569 = vmul.f32 %v537, 2.43
        %v570 = vmul.f32 %v538, 2.43
        %v571 = vmul.f32 %v539, 2.43
        %v572 = vmul.f32 %v540, 2.43
        %v573 = vmul.f32 %v541, 2.43
        %v574 = vmul.f32 %v542, 2.43
        %v575 = vadd.f32 %v567, 0.59
        %v576 = vadd.f32 %v568, 0.59
        %v577 = vadd.f32 %v569, 0.59
        %v578 = vadd.f32 %v570, 0.59
        %v579 = vadd.f32 %v571, 0.59
        %v580 = vadd.f32 %v572, 0.59
        %v581 = vadd.f32 %v573, 0.59
        %v582 = vadd.f32 %v574, 0.59
        %v583 = vmul.f32 %v535, %v575
        %v584 = vmul.f32 %v536, %v576
        %v585 = vmul.f32 %v537, %v577
        %v586 = vmul.f32 %v538, %v578
        %v587 = vmul.f32 %v539, %v579
        %v588 = vmul.f32 %v540, %v580
        %v589 = vmul.f32 %v541, %v581
        %v590 = vmul.f32 %v542, %v582
        %v591 = vadd.f32 %v583, 0.14
        %v592 = vadd.f32 %v584, 0.14
        %v593 = vadd.f32 %v585, 0.14
        %v594 = vadd.f32 %v586, 0.14
        %v595 = vadd.f32 %v587, 0.14
        %v596 = vadd.f32 %v588, 0.14
        %v597 = vadd.f32 %v589, 0.14
        %v598 = vadd.f32 %v590, 0.14
        %v599 = vrcp.pop %v591
        %v600 = vrcp.pop %v592
        %v601 = vrcp.pop %v593
        %v602 = vrcp.pop %v594
        %v603 = vrcp.pop %v595
        %v604 = vrcp.pop %v596
        %v605 = vrcp.pop %v597
        %v606 = vrcp.pop %v598
        %v607 = vmul.f32 %v591, %v599
        %v608 = vmul.f32 %v592, %v600
        %v609 = vmul.f32 %v593, %v601
        %v610 = vmul.f32 %v594, %v602
        %v611 = vmul.f32 %v595, %v603
        %v612 = vmul.f32 %v596, %v604
        %v613 = vmul.f32 %v597, %v605
        %v614 = vmul.f32 %v598, %v606
        %v615 = vsub.f32 2.0, %v607
        %v616 = vsub.f32 2.0, %v608
        %v617 = vsub.f32 2.0, %v609
        %v618 = vsub.f32 2.0, %v610
        %v619 = vsub.f32 2.0, %v611
        %v620 = vsub.f32 2.0, %v612
        %v621 = vsub.f32 2.0, %v613
        %v622 = vsub.f32 2.0, %v614
        %v623 = vmul.f32 %v599, %v615
        %v624 = vmul.f32 %v600, %v616
        %v625 = vmul.f32 %v601, %v617
        %v626 = vmul.f32 %v602, %v618
        %v627 = vmul.f32 %v603, %v619
        %v628 = vmul.f32 %v604, %v620
        %v629 = vmul.f32 %v605, %v621
        %v630 = vmul.f32 %v606, %v622
        %v631 = vmul.f32 %v559, %v623
        %v632 = vmul.f32 %v560, %v624
        %v633 = vmul.f32 %v561, %v625
        %v634 = vmul.f32 %v562, %v626
        %v635 = vmul.f32 %v563, %v627
        %v636 = vmul.f32 %v564, %v628
        %v637 = vmul.f32 %v565, %v629
        %v638 = vmul.f32 %v566, %v630
        %v639 = vmax.f32 %v631, 0.0
        %v640 = vmax.f32 %v632, 0.0
        %v641 = vmax.f32 %v633, 0.0
        %v642 = vmax.f32 %v634, 0.0
        %v643 = vmax.f32 %v635, 0.0
        %v644 = vmax.f32 %v636, 0.0
        %v645 = vmax.f32 %v637, 0.0
        %v646 = vmax.f32 %v638, 0.0
        %v647 = vmin.f32 %v639, 1.0
        %v648 = vmin.f32 %v640, 1.0
        %v649 = vmin.f32 %v641, 1.0
        %v650 = vmin.f32 %v642, 1.0
        %v651 = vmin.f32 %v643, 1.0
        %v652 = vmin.f32 %v644, 1.0
        %v653 = vmin.f32 %v645, 1.0
        %v654 = vmin.f32 %v646, 1.0
        %vm655 = vcmp.gt.f32.partialorder %v647, 0.0
        %vm656 = vcmp.gt.f32.partialorder %v648, 0.0
        %vm657 = vcmp.gt.f32.partialorder %v649, 0.0
        %vm658 = vcmp.gt.f32.partialorder %v650, 0.0
        %vm659 = vcmp.gt.f32.partialorder %v651, 0.0
        %vm660 = vcmp.gt.f32.partialorder %v652, 0.0
        %vm661 = vcmp.gt.f32.partialorder %v653, 0.0
        %vm662 = vcmp.gt.f32.partialorder %v654, 0.0
        %v663 = vsel %vm655, %v647, 1.0
        %v664 = vsel %vm656, %v648, 1.0
        %v665 = vsel %vm657, %v649, 1.0
        %v666 = vsel %vm658, %v650, 1.0
        %v667 = vsel %vm659, %v651, 1.0
        %v668 = vsel %vm660, %v652, 1.0
        %v669 = vsel %vm661, %v653, 1.0
        %v670 = vsel %vm662, %v654, 1.0
        %v671 = vlog2.pop %v663
        %v672 = vmul.f32 %v671, 0.6931472
        %v673 = vlog2.pop %v664
        %v674 = vmul.f32 %v673, 0.6931472
        %v675 = vlog2.pop %v665
        %v676 = vmul.f32 %v675, 0.6931472
        %v677 = vlog2.pop %v666
        %v678 = vmul.f32 %v677, 0.6931472
        %v679 = vlog2.pop %v667
        %v680 = vmul.f32 %v679, 0.6931472
        %v681 = vlog2.pop %v668
        %v682 = vmul.f32 %v681, 0.6931472
        %v683 = vlog2.pop %v669
        %v684 = vmul.f32 %v683, 0.6931472
        %v685 = vlog2.pop %v670
        %v686 = vmul.f32 %v685, 0.6931472
        %v687 = vmul.f32 %v672, 0.45454547
        %v688 = vmul.f32 %v674, 0.45454547
        %v689 = vmul.f32 %v676, 0.45454547
        %v690 = vmul.f32 %v678, 0.45454547
        %v691 = vmul.f32 %v680, 0.45454547
        %v692 = vmul.f32 %v682, 0.45454547
        %v693 = vmul.f32 %v684, 0.45454547
        %v694 = vmul.f32 %v686, 0.45454547
        %v695 = vmul.f32 %v687, 1.442695
        %v696 = vpow.pop %v695
        %v697 = vmul.f32 %v688, 1.442695
        %v698 = vpow.pop %v697
        %v699 = vmul.f32 %v689, 1.442695
        %v700 = vpow.pop %v699
        %v701 = vmul.f32 %v690, 1.442695
        %v702 = vpow.pop %v701
        %v703 = vmul.f32 %v691, 1.442695
        %v704 = vpow.pop %v703
        %v705 = vmul.f32 %v692, 1.442695
        %v706 = vpow.pop %v705
        %v707 = vmul.f32 %v693, 1.442695
        %v708 = vpow.pop %v707
        %v709 = vmul.f32 %v694, 1.442695
        %v710 = vpow.pop %v709
        %v711 = vsel %vm655, %v696, 0.0
        %v712 = vsel %vm656, %v698, 0.0
        %v713 = vsel %vm657, %v700, 0.0
        %v714 = vsel %vm658, %v702, 0.0
        %v715 = vsel %vm659, %v704, 0.0
        %v716 = vsel %vm660, %v706, 0.0
        %v717 = vsel %vm661, %v708, 0.0
        %v718 = vsel %vm662, %v710, 0.0
        %v719 = vmul.f32 %v455, %v455
        %v720 = vmul.f32 %v456, %v456
        %v721 = vmul.f32 %v457, %v457
        %v722 = vmul.f32 %v458, %v458
        %v723 = vmul.f32 %v459, %v459
        %v724 = vmul.f32 %v460, %v460
        %v725 = vmul.f32 %v461, %v461
        %v726 = vmul.f32 %v462, %v462
        %v727 = vmul.f32 %v711, %v711
        %v728 = vmul.f32 %v712, %v712
        %v729 = vmul.f32 %v713, %v713
        %v730 = vmul.f32 %v714, %v714
        %v731 = vmul.f32 %v715, %v715
        %v732 = vmul.f32 %v716, %v716
        %v733 = vmul.f32 %v717, %v717
        %v734 = vmul.f32 %v718, %v718
        %v735 = vmul.f32 %v455, %v711
        %v736 = vmul.f32 %v456, %v712
        %v737 = vmul.f32 %v457, %v713
        %v738 = vmul.f32 %v458, %v714
        %v739 = vmul.f32 %v459, %v715
        %v740 = vmul.f32 %v460, %v716
        %v741 = vmul.f32 %v461, %v717
        %v742 = vmul.f32 %v462, %v718
        %v743 = vpack.c.bf16 %v456, %v455
        %v744 = vpack.c.bf16 %v458, %v457
        %v745 = vpack.c.bf16 %v460, %v459
        %v746 = vpack.c.bf16 %v462, %v461
        %v747 = vpack.c.bf16 %v712, %v711
        %v748 = vpack.c.bf16 %v714, %v713
        %v749 = vpack.c.bf16 %v716, %v715
        %v750 = vpack.c.bf16 %v718, %v717
        %v751 = vpack.c.bf16 %v720, %v719
        %v752 = vpack.c.bf16 %v722, %v721
        %v753 = vpack.c.bf16 %v724, %v723
        %v754 = vpack.c.bf16 %v726, %v725
        %v755 = vpack.c.bf16 %v728, %v727
        %v756 = vpack.c.bf16 %v730, %v729
        %v757 = vpack.c.bf16 %v732, %v731
        %v758 = vpack.c.bf16 %v734, %v733
        %v759 = vpack.c.bf16 %v736, %v735
        %v760 = vpack.c.bf16 %v738, %v737
        %v761 = vpack.c.bf16 %v740, %v739
        %v762 = vpack.c.bf16 %v742, %v741
        %v763 = vlaneseq
        %v764 = vshrl.u32 %v763, 7
        %v765 = vadd.s32 %v764, 8
        %v766 = vlaneseq
        %v767 = vand.u32 %v766, 127
        %v768 = vsub.s32 %v764, %v767
        %v769 = vsub.s32 %v765, %v767
        %vm770 = vcmp.eq.s32.totalorder %v768, 0
        %vm771 = vcmp.eq.s32.totalorder %v769, 0
        %v772 = vsel %vm770, 0.0010283801, 0.0
        %v773 = vsel %vm771, 0.0010283801, 0.0
        %vm774 = vcmp.eq.s32.totalorder %v768, 1
        %vm775 = vcmp.eq.s32.totalorder %v769, 1
        %v776 = vsel %vm774, 0.007598758, %v772
        %v777 = vsel %vm775, 0.007598758, %v773
        %vm778 = vcmp.eq.s32.totalorder %v768, 2
        %vm779 = vcmp.eq.s32.totalorder %v769, 2
        %v780 = vsel %vm778, 0.036000773, %v776
        %v781 = vsel %vm779, 0.036000773, %v777
        %vm782 = vcmp.eq.s32.totalorder %v768, 3
        %vm783 = vcmp.eq.s32.totalorder %v769, 3
        %v784 = vsel %vm782, 0.10936069, %v780
        %v785 = vsel %vm783, 0.10936069, %v781
        %vm786 = vcmp.eq.s32.totalorder %v768, 4
        %vm787 = vcmp.eq.s32.totalorder %v769, 4
        %v788 = vsel %vm786, 0.21300554, %v784
        %v789 = vsel %vm787, 0.21300554, %v785
        %vm790 = vcmp.eq.s32.totalorder %v768, 5
        %vm791 = vcmp.eq.s32.totalorder %v769, 5
        %v792 = vsel %vm790, 0.26601171, %v788
        %v793 = vsel %vm791, 0.26601171, %v789
        %vm794 = vcmp.eq.s32.totalorder %v768, 6
        %vm795 = vcmp.eq.s32.totalorder %v769, 6
        %v796 = vsel %vm794, 0.21300554, %v792
        %v797 = vsel %vm795, 0.21300554, %v793
        %vm798 = vcmp.eq.s32.totalorder %v768, 7
        %vm799 = vcmp.eq.s32.totalorder %v769, 7
        %v800 = vsel %vm798, 0.10936069, %v796
        %v801 = vsel %vm799, 0.10936069, %v797
        %vm802 = vcmp.eq.s32.totalorder %v768, 8
        %vm803 = vcmp.eq.s32.totalorder %v769, 8
        %v804 = vsel %vm802, 0.036000773, %v800
        %v805 = vsel %vm803, 0.036000773, %v801
        %vm806 = vcmp.eq.s32.totalorder %v768, 9
        %vm807 = vcmp.eq.s32.totalorder %v769, 9
        %v808 = vsel %vm806, 0.007598758, %v804
        %v809 = vsel %vm807, 0.007598758, %v805
        %vm810 = vcmp.eq.s32.totalorder %v768, 10
        %vm811 = vcmp.eq.s32.totalorder %v769, 10
        %v812 = vsel %vm810, 0.0010283801, %v808
        %v813 = vsel %vm811, 0.0010283801, %v809
        %v814 = vpack.c.bf16 %v813, %v812
        %v815 = vsub.s32 %v767, %v764
        %vm816 = vcmp.eq.s32.totalorder %v815, 0
        %v817 = vsel %vm816, 0.0010283801, 0.0
        %vm818 = vcmp.eq.s32.totalorder %v815, 1
        %v819 = vsel %vm818, 0.007598758, %v817
        %vm820 = vcmp.eq.s32.totalorder %v815, 2
        %v821 = vsel %vm820, 0.036000773, %v819
        %vm822 = vcmp.eq.s32.totalorder %v815, 3
        %v823 = vsel %vm822, 0.10936069, %v821
        %vm824 = vcmp.eq.s32.totalorder %v815, 4
        %v825 = vsel %vm824, 0.21300554, %v823
        %vm826 = vcmp.eq.s32.totalorder %v815, 5
        %v827 = vsel %vm826, 0.26601171, %v825
        %vm828 = vcmp.eq.s32.totalorder %v815, 6
        %v829 = vsel %vm828, 0.21300554, %v827
        %vm830 = vcmp.eq.s32.totalorder %v815, 7
        %v831 = vsel %vm830, 0.10936069, %v829
        %vm832 = vcmp.eq.s32.totalorder %v815, 8
        %v833 = vsel %vm832, 0.036000773, %v831
        %vm834 = vcmp.eq.s32.totalorder %v815, 9
        %v835 = vsel %vm834, 0.007598758, %v833
        %vm836 = vcmp.eq.s32.totalorder %v815, 10
        %v837 = vsel %vm836, 0.0010283801, %v835
        %v838 = vpack.c.bf16 %v837, %v837
        %vm839 = vcmask 130048
        %v841 = vsel %vm839, %v743, 0
        %v844 = vsel %vm839, %v744, 0
        %v847 = vsel %vm839, %v745, 0
        %v850 = vsel %vm839, %v746, 0
        %v853 = vsel %vm839, %v747, 0
        %v856 = vsel %vm839, %v748, 0
        %v859 = vsel %vm839, %v749, 0
        %v862 = vsel %vm839, %v750, 0
        %v865 = vsel %vm839, %v751, 0
        %v868 = vsel %vm839, %v752, 0
        %v871 = vsel %vm839, %v753, 0
        %v874 = vsel %vm839, %v754, 0
        %v877 = vsel %vm839, %v755, 0
        %v880 = vsel %vm839, %v756, 0
        %v883 = vsel %vm839, %v757, 0
        %v886 = vsel %vm839, %v758, 0
        %v889 = vsel %vm839, %v759, 0
        %v892 = vsel %vm839, %v760, 0
        %v895 = vsel %vm839, %v761, 0
        %v898 = vsel %vm839, %v762, 0
        %900 = vmatprep.subr.bf16.mxu0 0
        %901 = vmatpush1.bf16.msra.mxu0 %v814
        %902 = vmatprep.subr.bf16.mxu0 0
        %903 = vmatpush1.bf16.msra.mxu0 0
        %904 = vmatprep.subr.bf16.mxu0 0
        %905 = vmatpush1.bf16.msra.mxu0 0
        %906 = vmatprep.subr.bf16.mxu0 0
        %907 = vmatpush1.bf16.msra.mxu0 0
        %908 = vmatprep.subr.bf16.mxu0 0
        %909 = vmatpush1.bf16.msra.mxu0 0
        %910 = vmatprep.subr.bf16.mxu0 0
        %911 = vmatpush1.bf16.msra.mxu0 0
        %912 = vmatprep.subr.bf16.mxu0 0
        %913 = vmatpush1.bf16.msra.mxu0 0
        %914 = vmatprep.subr.bf16.mxu0 0
        %915 = vmatpush1.bf16.msra.mxu0 0
        %916 = vmatprep.subr.bf16.mxu0 0
        %917 = vmatpush1.bf16.msra.mxu0 0
        %918 = vmatprep.subr.bf16.mxu0 0
        %919 = vmatpush1.bf16.msra.mxu0 0
        %920 = vmatprep.subr.bf16.mxu0 0
        %921 = vmatpush1.bf16.msra.mxu0 0
        %922 = vmatprep.subr.bf16.mxu0 0
        %923 = vmatpush1.bf16.msra.mxu0 0
        %924 = vmatprep.subr.bf16.mxu0 0
        %925 = vmatpush1.bf16.msra.mxu0 0
        %926 = vmatprep.subr.bf16.mxu0 0
        %927 = vmatpush1.bf16.msra.mxu0 0
        %928 = vmatprep.subr.bf16.mxu0 0
        %929 = vmatpush1.bf16.msra.mxu0 0
        %930 = vmatprep.subr.bf16.mxu0 0
        %931 = vmatpush1.bf16.msra.mxu0 0
        %932 = vmatprep.mubr.bf16.mxu0 0
        %933 = vmatmul.mubr.bf16.gmra.mrb[0].mxu0 %v841
        %v934 = vpop.f32.mrb[0].mxu0
        %v935 = vadd.f32 0.0, %v934
        %v936 = vpop.f32.mrb[0].mxu0
        %v937 = vpop.f32.mrb[0].mxu0
        %v938 = vadd.f32 0.0, %v937
        %v939 = vpop.f32.mrb[0].mxu0
        %940 = vmatprep.mubr.bf16.mxu0 0
        %941 = vmatmul.mubr.bf16.gmra.mrb[0].mxu0 %v844
        %v942 = vpop.f32.mrb[0].mxu0
        %v943 = vadd.f32 0.0, %v942
        %v944 = vpop.f32.mrb[0].mxu0
        %v945 = vpop.f32.mrb[0].mxu0
        %v946 = vadd.f32 0.0, %v945
        %v947 = vpop.f32.mrb[0].mxu0
        %948 = vmatprep.mubr.bf16.mxu0 0
        %949 = vmatmul.mubr.bf16.gmra.mrb[0].mxu0 %v847
        %v950 = vpop.f32.mrb[0].mxu0
        %v951 = vadd.f32 0.0, %v950
        %v952 = vpop.f32.mrb[0].mxu0
        %v953 = vpop.f32.mrb[0].mxu0
        %v954 = vadd.f32 0.0, %v953
        %v955 = vpop.f32.mrb[0].mxu0
        %956 = vmatprep.mubr.bf16.mxu0 0
        %957 = vmatmul.mubr.bf16.gmra.mrb[0].mxu0 %v850
        %v958 = vpop.f32.mrb[0].mxu0
        %v959 = vadd.f32 0.0, %v958
        %v960 = vpop.f32.mrb[0].mxu0
        %v961 = vpop.f32.mrb[0].mxu0
        %v962 = vadd.f32 0.0, %v961
        %v963 = vpop.f32.mrb[0].mxu0
        %964 = vmatprep.mubr.bf16.mxu0 0
        %965 = vmatmul.mubr.bf16.gmra.mrb[0].mxu0 %v853
        %v966 = vpop.f32.mrb[0].mxu0
        %v967 = vadd.f32 0.0, %v966
        %v968 = vpop.f32.mrb[0].mxu0
        %v969 = vpop.f32.mrb[0].mxu0
        %v970 = vadd.f32 0.0, %v969
        %v971 = vpop.f32.mrb[0].mxu0
        %972 = vmatprep.mubr.bf16.mxu0 0
        %973 = vmatmul.mubr.bf16.gmra.mrb[0].mxu0 %v856
        %v974 = vpop.f32.mrb[0].mxu0
        %v975 = vadd.f32 0.0, %v974
        %v976 = vpop.f32.mrb[0].mxu0
        %v977 = vpop.f32.mrb[0].mxu0
        %v978 = vadd.f32 0.0, %v977
        %v979 = vpop.f32.mrb[0].mxu0
        %980 = vmatprep.mubr.bf16.mxu0 0
        %981 = vmatmul.mubr.bf16.gmra.mrb[0].mxu0 %v859
        %v982 = vpop.f32.mrb[0].mxu0
        %v983 = vadd.f32 0.0, %v982
        %v984 = vpop.f32.mrb[0].mxu0
        %v985 = vpop.f32.mrb[0].mxu0
        %v986 = vadd.f32 0.0, %v985
        %v987 = vpop.f32.mrb[0].mxu0
        %988 = vmatprep.mubr.bf16.mxu0 0
        %989 = vmatmul.mubr.bf16.gmra.mrb[0].mxu0 %v862
        %v990 = vpop.f32.mrb[0].mxu0
        %v991 = vadd.f32 0.0, %v990
        %v992 = vpop.f32.mrb[0].mxu0
        %v993 = vpop.f32.mrb[0].mxu0
        %v994 = vadd.f32 0.0, %v993
        %v995 = vpop.f32.mrb[0].mxu0
        %996 = vmatprep.mubr.bf16.mxu0 0
        %997 = vmatmul.mubr.bf16.gmra.mrb[0].mxu0 %v865
        %v998 = vpop.f32.mrb[0].mxu0
        %v999 = vadd.f32 0.0, %v998
        %v1000 = vpop.f32.mrb[0].mxu0
        %v1001 = vpop.f32.mrb[0].mxu0
        %v1002 = vadd.f32 0.0, %v1001
        %v1003 = vpop.f32.mrb[0].mxu0
        %1004 = vmatprep.mubr.bf16.mxu0 0
        %1005 = vmatmul.mubr.bf16.gmra.mrb[0].mxu0 %v868
        %v1006 = vpop.f32.mrb[0].mxu0
        %v1007 = vadd.f32 0.0, %v1006
        %v1008 = vpop.f32.mrb[0].mxu0
        %v1009 = vpop.f32.mrb[0].mxu0
        %v1010 = vadd.f32 0.0, %v1009
        %v1011 = vpop.f32.mrb[0].mxu0
        %1012 = vmatprep.mubr.bf16.mxu0 0
        %1013 = vmatmul.mubr.bf16.gmra.mrb[0].mxu0 %v871
        %v1014 = vpop.f32.mrb[0].mxu0
        %v1015 = vadd.f32 0.0, %v1014
        %v1016 = vpop.f32.mrb[0].mxu0
        %v1017 = vpop.f32.mrb[0].mxu0
        %v1018 = vadd.f32 0.0, %v1017
        %v1019 = vpop.f32.mrb[0].mxu0
        %1020 = vmatprep.mubr.bf16.mxu0 0
        %1021 = vmatmul.mubr.bf16.gmra.mrb[0].mxu0 %v874
        %v1022 = vpop.f32.mrb[0].mxu0
        %v1023 = vadd.f32 0.0, %v1022
        %v1024 = vpop.f32.mrb[0].mxu0
        %v1025 = vpop.f32.mrb[0].mxu0
        %v1026 = vadd.f32 0.0, %v1025
        %v1027 = vpop.f32.mrb[0].mxu0
        %1028 = vmatprep.mubr.bf16.mxu0 0
        %1029 = vmatmul.mubr.bf16.gmra.mrb[0].mxu0 %v877
        %v1030 = vpop.f32.mrb[0].mxu0
        %v1031 = vadd.f32 0.0, %v1030
        %v1032 = vpop.f32.mrb[0].mxu0
        %v1033 = vpop.f32.mrb[0].mxu0
        %v1034 = vadd.f32 0.0, %v1033
        %v1035 = vpop.f32.mrb[0].mxu0
        %1036 = vmatprep.mubr.bf16.mxu0 0
        %1037 = vmatmul.mubr.bf16.gmra.mrb[0].mxu0 %v880
        %v1038 = vpop.f32.mrb[0].mxu0
        %v1039 = vadd.f32 0.0, %v1038
        %v1040 = vpop.f32.mrb[0].mxu0
        %v1041 = vpop.f32.mrb[0].mxu0
        %v1042 = vadd.f32 0.0, %v1041
        %v1043 = vpop.f32.mrb[0].mxu0
        %1044 = vmatprep.mubr.bf16.mxu0 0
        %1045 = vmatmul.mubr.bf16.gmra.mrb[0].mxu0 %v883
        %v1046 = vpop.f32.mrb[0].mxu0
        %v1047 = vadd.f32 0.0, %v1046
        %v1048 = vpop.f32.mrb[0].mxu0
        %v1049 = vpop.f32.mrb[0].mxu0
        %v1050 = vadd.f32 0.0, %v1049
        %v1051 = vpop.f32.mrb[0].mxu0
        %1052 = vmatprep.mubr.bf16.mxu0 0
        %1053 = vmatmul.mubr.bf16.gmra.mrb[0].mxu0 %v886
        %v1054 = vpop.f32.mrb[0].mxu0
        %v1055 = vadd.f32 0.0, %v1054
        %v1056 = vpop.f32.mrb[0].mxu0
        %v1057 = vpop.f32.mrb[0].mxu0
        %v1058 = vadd.f32 0.0, %v1057
        %v1059 = vpop.f32.mrb[0].mxu0
        %1060 = vmatprep.mubr.bf16.mxu0 0
        %1061 = vmatmul.mubr.bf16.gmra.mrb[0].mxu0 %v889
        %v1062 = vpop.f32.mrb[0].mxu0
        %v1063 = vadd.f32 0.0, %v1062
        %v1064 = vpop.f32.mrb[0].mxu0
        %v1065 = vpop.f32.mrb[0].mxu0
        %v1066 = vadd.f32 0.0, %v1065
        %v1067 = vpop.f32.mrb[0].mxu0
        %1068 = vmatprep.mubr.bf16.mxu0 0
        %1069 = vmatmul.mubr.bf16.gmra.mrb[0].mxu0 %v892
        %v1070 = vpop.f32.mrb[0].mxu0
        %v1071 = vadd.f32 0.0, %v1070
        %v1072 = vpop.f32.mrb[0].mxu0
        %v1073 = vpop.f32.mrb[0].mxu0
        %v1074 = vadd.f32 0.0, %v1073
        %v1075 = vpop.f32.mrb[0].mxu0
        %1076 = vmatprep.mubr.bf16.mxu0 0
        %1077 = vmatmul.mubr.bf16.gmra.mrb[0].mxu0 %v895
        %v1078 = vpop.f32.mrb[0].mxu0
        %v1079 = vadd.f32 0.0, %v1078
        %v1080 = vpop.f32.mrb[0].mxu0
        %v1081 = vpop.f32.mrb[0].mxu0
        %v1082 = vadd.f32 0.0, %v1081
        %v1083 = vpop.f32.mrb[0].mxu0
        %1084 = vmatprep.mubr.bf16.mxu0 0
        %1085 = vmatmul.mubr.bf16.gmra.mrb[0].mxu0 %v898
        %v1086 = vpop.f32.mrb[0].mxu0
        %v1087 = vadd.f32 0.0, %v1086
        %v1088 = vpop.f32.mrb[0].mxu0
        %v1089 = vpop.f32.mrb[0].mxu0
        %v1090 = vadd.f32 0.0, %v1089
        %v1091 = vpop.f32.mrb[0].mxu0
        %1092 = vdwg.mxu0
        %v1093 = vpack.c.bf16 %v938, %v935
        %v1094 = vpack.c.bf16 %v946, %v943
        %v1095 = vpack.c.bf16 %v954, %v951
        %v1096 = vpack.c.bf16 %v962, %v959
        %v1097 = vpack.c.bf16 %v970, %v967
        %v1098 = vpack.c.bf16 %v978, %v975
        %v1099 = vpack.c.bf16 %v986, %v983
        %v1100 = vpack.c.bf16 %v994, %v991
        %v1101 = vpack.c.bf16 %v1002, %v999
        %v1102 = vpack.c.bf16 %v1010, %v1007
        %v1103 = vpack.c.bf16 %v1018, %v1015
        %v1104 = vpack.c.bf16 %v1026, %v1023
        %v1105 = vpack.c.bf16 %v1034, %v1031
        %v1106 = vpack.c.bf16 %v1042, %v1039
        %v1107 = vpack.c.bf16 %v1050, %v1047
        %v1108 = vpack.c.bf16 %v1058, %v1055
        %v1109 = vpack.c.bf16 %v1066, %v1063
        %v1110 = vpack.c.bf16 %v1074, %v1071
        %v1111 = vpack.c.bf16 %v1082, %v1079
        %v1112 = vpack.c.bf16 %v1090, %v1087
        %v1114 = vsel %vm839, %v838, 0
        %1116 = vmatprep.subr.bf16.mxu0 0
        %1117 = vmatpush1.bf16.msra.mxu0 %v1093
        %1118 = vmatprep.subr.bf16.mxu0 0
        %1119 = vmatpush1.bf16.msra.mxu0 0
        %1120 = vmatprep.subr.bf16.mxu0 0
        %1121 = vmatpush1.bf16.msra.mxu0 0
        %1122 = vmatprep.subr.bf16.mxu0 0
        %1123 = vmatpush1.bf16.msra.mxu0 0
        %1124 = vmatprep.subr.bf16.mxu0 0
        %1125 = vmatpush1.bf16.msra.mxu0 0
        %1126 = vmatprep.subr.bf16.mxu0 0
        %1127 = vmatpush1.bf16.msra.mxu0 0
        %1128 = vmatprep.subr.bf16.mxu0 0
        %1129 = vmatpush1.bf16.msra.mxu0 0
        %1130 = vmatprep.subr.bf16.mxu0 0
        %1131 = vmatpush1.bf16.msra.mxu0 0
        %1132 = vmatprep.subr.bf16.mxu0 0
        %1133 = vmatpush1.bf16.msra.mxu0 0
        %1134 = vmatprep.subr.bf16.mxu0 0
        %1135 = vmatpush1.bf16.msra.mxu0 0
        %1136 = vmatprep.subr.bf16.mxu0 0
        %1137 = vmatpush1.bf16.msra.mxu0 0
        %1138 = vmatprep.subr.bf16.mxu0 0
        %1139 = vmatpush1.bf16.msra.mxu0 0
        %1140 = vmatprep.subr.bf16.mxu0 0
        %1141 = vmatpush1.bf16.msra.mxu0 0
        %1142 = vmatprep.subr.bf16.mxu0 0
        %1143 = vmatpush1.bf16.msra.mxu0 0
        %1144 = vmatprep.subr.bf16.mxu0 0
        %1145 = vmatpush1.bf16.msra.mxu0 0
        %1146 = vmatprep.subr.bf16.mxu0 0
        %1147 = vmatpush1.bf16.msra.mxu0 0
        %1148 = vmatprep.mubr.bf16.mxu0 0
        %1149 = vmatmul.mubr.bf16.gmra.mrb[0].mxu0 %v1114
        %v1150 = vpop.f32.mrb[0].mxu0
        %v1151 = vadd.f32 0.0, %v1150
        %v1152 = vpop.f32.mrb[0].mxu0
        %v1153 = vpop.f32.mrb[0].mxu0
        %v1154 = vpop.f32.mrb[0].mxu0
        %1155 = vdwg.mxu0
        %1156 = vmatprep.subr.bf16.mxu0 0
        %1157 = vmatpush1.bf16.msra.mxu0 %v1094
        %1158 = vmatprep.subr.bf16.mxu0 0
        %1159 = vmatpush1.bf16.msra.mxu0 0
        %1160 = vmatprep.subr.bf16.mxu0 0
        %1161 = vmatpush1.bf16.msra.mxu0 0
        %1162 = vmatprep.subr.bf16.mxu0 0
        %1163 = vmatpush1.bf16.msra.mxu0 0
        %1164 = vmatprep.subr.bf16.mxu0 0
        %1165 = vmatpush1.bf16.msra.mxu0 0
        %1166 = vmatprep.subr.bf16.mxu0 0
        %1167 = vmatpush1.bf16.msra.mxu0 0
        %1168 = vmatprep.subr.bf16.mxu0 0
        %1169 = vmatpush1.bf16.msra.mxu0 0
        %1170 = vmatprep.subr.bf16.mxu0 0
        %1171 = vmatpush1.bf16.msra.mxu0 0
        %1172 = vmatprep.subr.bf16.mxu0 0
        %1173 = vmatpush1.bf16.msra.mxu0 0
        %1174 = vmatprep.subr.bf16.mxu0 0
        %1175 = vmatpush1.bf16.msra.mxu0 0
        %1176 = vmatprep.subr.bf16.mxu0 0
        %1177 = vmatpush1.bf16.msra.mxu0 0
        %1178 = vmatprep.subr.bf16.mxu0 0
        %1179 = vmatpush1.bf16.msra.mxu0 0
        %1180 = vmatprep.subr.bf16.mxu0 0
        %1181 = vmatpush1.bf16.msra.mxu0 0
        %1182 = vmatprep.subr.bf16.mxu0 0
        %1183 = vmatpush1.bf16.msra.mxu0 0
        %1184 = vmatprep.subr.bf16.mxu0 0
        %1185 = vmatpush1.bf16.msra.mxu0 0
        %1186 = vmatprep.subr.bf16.mxu0 0
        %1187 = vmatpush1.bf16.msra.mxu0 0
        %1188 = vmatprep.mubr.bf16.mxu0 0
        %1189 = vmatmul.mubr.bf16.gmra.mrb[0].mxu0 %v1114
        %v1190 = vpop.f32.mrb[0].mxu0
        %v1191 = vadd.f32 0.0, %v1190
        %v1192 = vpop.f32.mrb[0].mxu0
        %v1193 = vpop.f32.mrb[0].mxu0
        %v1194 = vpop.f32.mrb[0].mxu0
        %1195 = vdwg.mxu0
        %1196 = vmatprep.subr.bf16.mxu0 0
        %1197 = vmatpush1.bf16.msra.mxu0 %v1095
        %1198 = vmatprep.subr.bf16.mxu0 0
        %1199 = vmatpush1.bf16.msra.mxu0 0
        %1200 = vmatprep.subr.bf16.mxu0 0
        %1201 = vmatpush1.bf16.msra.mxu0 0
        %1202 = vmatprep.subr.bf16.mxu0 0
        %1203 = vmatpush1.bf16.msra.mxu0 0
        %1204 = vmatprep.subr.bf16.mxu0 0
        %1205 = vmatpush1.bf16.msra.mxu0 0
        %1206 = vmatprep.subr.bf16.mxu0 0
        %1207 = vmatpush1.bf16.msra.mxu0 0
        %1208 = vmatprep.subr.bf16.mxu0 0
        %1209 = vmatpush1.bf16.msra.mxu0 0
        %1210 = vmatprep.subr.bf16.mxu0 0
        %1211 = vmatpush1.bf16.msra.mxu0 0
        %1212 = vmatprep.subr.bf16.mxu0 0
        %1213 = vmatpush1.bf16.msra.mxu0 0
        %1214 = vmatprep.subr.bf16.mxu0 0
        %1215 = vmatpush1.bf16.msra.mxu0 0
        %1216 = vmatprep.subr.bf16.mxu0 0
        %1217 = vmatpush1.bf16.msra.mxu0 0
        %1218 = vmatprep.subr.bf16.mxu0 0
        %1219 = vmatpush1.bf16.msra.mxu0 0
        %1220 = vmatprep.subr.bf16.mxu0 0
        %1221 = vmatpush1.bf16.msra.mxu0 0
        %1222 = vmatprep.subr.bf16.mxu0 0
        %1223 = vmatpush1.bf16.msra.mxu0 0
        %1224 = vmatprep.subr.bf16.mxu0 0
        %1225 = vmatpush1.bf16.msra.mxu0 0
        %1226 = vmatprep.subr.bf16.mxu0 0
        %1227 = vmatpush1.bf16.msra.mxu0 0
        %1228 = vmatprep.mubr.bf16.mxu0 0
        %1229 = vmatmul.mubr.bf16.gmra.mrb[0].mxu0 %v1114
        %v1230 = vpop.f32.mrb[0].mxu0
        %v1231 = vadd.f32 0.0, %v1230
        %v1232 = vpop.f32.mrb[0].mxu0
        %v1233 = vpop.f32.mrb[0].mxu0
        %v1234 = vpop.f32.mrb[0].mxu0
        %1235 = vdwg.mxu0
        %1236 = vmatprep.subr.bf16.mxu0 0
        %1237 = vmatpush1.bf16.msra.mxu0 %v1096
        %1238 = vmatprep.subr.bf16.mxu0 0
        %1239 = vmatpush1.bf16.msra.mxu0 0
        %1240 = vmatprep.subr.bf16.mxu0 0
        %1241 = vmatpush1.bf16.msra.mxu0 0
        %1242 = vmatprep.subr.bf16.mxu0 0
        %1243 = vmatpush1.bf16.msra.mxu0 0
        %1244 = vmatprep.subr.bf16.mxu0 0
        %1245 = vmatpush1.bf16.msra.mxu0 0
        %1246 = vmatprep.subr.bf16.mxu0 0
        %1247 = vmatpush1.bf16.msra.mxu0 0
        %1248 = vmatprep.subr.bf16.mxu0 0
        %1249 = vmatpush1.bf16.msra.mxu0 0
        %1250 = vmatprep.subr.bf16.mxu0 0
        %1251 = vmatpush1.bf16.msra.mxu0 0
        %1252 = vmatprep.subr.bf16.mxu0 0
        %1253 = vmatpush1.bf16.msra.mxu0 0
        %1254 = vmatprep.subr.bf16.mxu0 0
        %1255 = vmatpush1.bf16.msra.mxu0 0
        %1256 = vmatprep.subr.bf16.mxu0 0
        %1257 = vmatpush1.bf16.msra.mxu0 0
        %1258 = vmatprep.subr.bf16.mxu0 0
        %1259 = vmatpush1.bf16.msra.mxu0 0
        %1260 = vmatprep.subr.bf16.mxu0 0
        %1261 = vmatpush1.bf16.msra.mxu0 0
        %1262 = vmatprep.subr.bf16.mxu0 0
        %1263 = vmatpush1.bf16.msra.mxu0 0
        %1264 = vmatprep.subr.bf16.mxu0 0
        %1265 = vmatpush1.bf16.msra.mxu0 0
        %1266 = vmatprep.subr.bf16.mxu0 0
        %1267 = vmatpush1.bf16.msra.mxu0 0
        %1268 = vmatprep.mubr.bf16.mxu0 0
        %1269 = vmatmul.mubr.bf16.gmra.mrb[0].mxu0 %v1114
        %v1270 = vpop.f32.mrb[0].mxu0
        %v1271 = vadd.f32 0.0, %v1270
        %v1272 = vpop.f32.mrb[0].mxu0
        %v1273 = vpop.f32.mrb[0].mxu0
        %v1274 = vpop.f32.mrb[0].mxu0
        %1275 = vdwg.mxu0
        %1276 = vmatprep.subr.bf16.mxu0 0
        %1277 = vmatpush1.bf16.msra.mxu0 %v1097
        %1278 = vmatprep.subr.bf16.mxu0 0
        %1279 = vmatpush1.bf16.msra.mxu0 0
        %1280 = vmatprep.subr.bf16.mxu0 0
        %1281 = vmatpush1.bf16.msra.mxu0 0
        %1282 = vmatprep.subr.bf16.mxu0 0
        %1283 = vmatpush1.bf16.msra.mxu0 0
        %1284 = vmatprep.subr.bf16.mxu0 0
        %1285 = vmatpush1.bf16.msra.mxu0 0
        %1286 = vmatprep.subr.bf16.mxu0 0
        %1287 = vmatpush1.bf16.msra.mxu0 0
        %1288 = vmatprep.subr.bf16.mxu0 0
        %1289 = vmatpush1.bf16.msra.mxu0 0
        %1290 = vmatprep.subr.bf16.mxu0 0
        %1291 = vmatpush1.bf16.msra.mxu0 0
        %1292 = vmatprep.subr.bf16.mxu0 0
        %1293 = vmatpush1.bf16.msra.mxu0 0
        %1294 = vmatprep.subr.bf16.mxu0 0
        %1295 = vmatpush1.bf16.msra.mxu0 0
        %1296 = vmatprep.subr.bf16.mxu0 0
        %1297 = vmatpush1.bf16.msra.mxu0 0
        %1298 = vmatprep.subr.bf16.mxu0 0
        %1299 = vmatpush1.bf16.msra.mxu0 0
        %1300 = vmatprep.subr.bf16.mxu0 0
        %1301 = vmatpush1.bf16.msra.mxu0 0
        %1302 = vmatprep.subr.bf16.mxu0 0
        %1303 = vmatpush1.bf16.msra.mxu0 0
        %1304 = vmatprep.subr.bf16.mxu0 0
        %1305 = vmatpush1.bf16.msra.mxu0 0
        %1306 = vmatprep.subr.bf16.mxu0 0
        %1307 = vmatpush1.bf16.msra.mxu0 0
        %1308 = vmatprep.mubr.bf16.mxu0 0
        %1309 = vmatmul.mubr.bf16.gmra.mrb[0].mxu0 %v1114
        %v1310 = vpop.f32.mrb[0].mxu0
        %v1311 = vadd.f32 0.0, %v1310
        %v1312 = vpop.f32.mrb[0].mxu0
        %v1313 = vpop.f32.mrb[0].mxu0
        %v1314 = vpop.f32.mrb[0].mxu0
        %1315 = vdwg.mxu0
        %1316 = vmatprep.subr.bf16.mxu0 0
        %1317 = vmatpush1.bf16.msra.mxu0 %v1098
        %1318 = vmatprep.subr.bf16.mxu0 0
        %1319 = vmatpush1.bf16.msra.mxu0 0
        %1320 = vmatprep.subr.bf16.mxu0 0
        %1321 = vmatpush1.bf16.msra.mxu0 0
        %1322 = vmatprep.subr.bf16.mxu0 0
        %1323 = vmatpush1.bf16.msra.mxu0 0
        %1324 = vmatprep.subr.bf16.mxu0 0
        %1325 = vmatpush1.bf16.msra.mxu0 0
        %1326 = vmatprep.subr.bf16.mxu0 0
        %1327 = vmatpush1.bf16.msra.mxu0 0
        %1328 = vmatprep.subr.bf16.mxu0 0
        %1329 = vmatpush1.bf16.msra.mxu0 0
        %1330 = vmatprep.subr.bf16.mxu0 0
        %1331 = vmatpush1.bf16.msra.mxu0 0
        %1332 = vmatprep.subr.bf16.mxu0 0
        %1333 = vmatpush1.bf16.msra.mxu0 0
        %1334 = vmatprep.subr.bf16.mxu0 0
        %1335 = vmatpush1.bf16.msra.mxu0 0
        %1336 = vmatprep.subr.bf16.mxu0 0
        %1337 = vmatpush1.bf16.msra.mxu0 0
        %1338 = vmatprep.subr.bf16.mxu0 0
        %1339 = vmatpush1.bf16.msra.mxu0 0
        %1340 = vmatprep.subr.bf16.mxu0 0
        %1341 = vmatpush1.bf16.msra.mxu0 0
        %1342 = vmatprep.subr.bf16.mxu0 0
        %1343 = vmatpush1.bf16.msra.mxu0 0
        %1344 = vmatprep.subr.bf16.mxu0 0
        %1345 = vmatpush1.bf16.msra.mxu0 0
        %1346 = vmatprep.subr.bf16.mxu0 0
        %1347 = vmatpush1.bf16.msra.mxu0 0
        %1348 = vmatprep.mubr.bf16.mxu0 0
        %1349 = vmatmul.mubr.bf16.gmra.mrb[0].mxu0 %v1114
        %v1350 = vpop.f32.mrb[0].mxu0
        %v1351 = vadd.f32 0.0, %v1350
        %v1352 = vpop.f32.mrb[0].mxu0
        %v1353 = vpop.f32.mrb[0].mxu0
        %v1354 = vpop.f32.mrb[0].mxu0
        %1355 = vdwg.mxu0
        %1356 = vmatprep.subr.bf16.mxu0 0
        %1357 = vmatpush1.bf16.msra.mxu0 %v1099
        %1358 = vmatprep.subr.bf16.mxu0 0
        %1359 = vmatpush1.bf16.msra.mxu0 0
        %1360 = vmatprep.subr.bf16.mxu0 0
        %1361 = vmatpush1.bf16.msra.mxu0 0
        %1362 = vmatprep.subr.bf16.mxu0 0
        %1363 = vmatpush1.bf16.msra.mxu0 0
        %1364 = vmatprep.subr.bf16.mxu0 0
        %1365 = vmatpush1.bf16.msra.mxu0 0
        %1366 = vmatprep.subr.bf16.mxu0 0
        %1367 = vmatpush1.bf16.msra.mxu0 0
        %1368 = vmatprep.subr.bf16.mxu0 0
        %1369 = vmatpush1.bf16.msra.mxu0 0
        %1370 = vmatprep.subr.bf16.mxu0 0
        %1371 = vmatpush1.bf16.msra.mxu0 0
        %1372 = vmatprep.subr.bf16.mxu0 0
        %1373 = vmatpush1.bf16.msra.mxu0 0
        %1374 = vmatprep.subr.bf16.mxu0 0
        %1375 = vmatpush1.bf16.msra.mxu0 0
        %1376 = vmatprep.subr.bf16.mxu0 0
        %1377 = vmatpush1.bf16.msra.mxu0 0
        %1378 = vmatprep.subr.bf16.mxu0 0
        %1379 = vmatpush1.bf16.msra.mxu0 0
        %1380 = vmatprep.subr.bf16.mxu0 0
        %1381 = vmatpush1.bf16.msra.mxu0 0
        %1382 = vmatprep.subr.bf16.mxu0 0
        %1383 = vmatpush1.bf16.msra.mxu0 0
        %1384 = vmatprep.subr.bf16.mxu0 0
        %1385 = vmatpush1.bf16.msra.mxu0 0
        %1386 = vmatprep.subr.bf16.mxu0 0
        %1387 = vmatpush1.bf16.msra.mxu0 0
        %1388 = vmatprep.mubr.bf16.mxu0 0
        %1389 = vmatmul.mubr.bf16.gmra.mrb[0].mxu0 %v1114
        %v1390 = vpop.f32.mrb[0].mxu0
        %v1391 = vadd.f32 0.0, %v1390
        %v1392 = vpop.f32.mrb[0].mxu0
        %v1393 = vpop.f32.mrb[0].mxu0
        %v1394 = vpop.f32.mrb[0].mxu0
        %1395 = vdwg.mxu0
        %1396 = vmatprep.subr.bf16.mxu0 0
        %1397 = vmatpush1.bf16.msra.mxu0 %v1100
        %1398 = vmatprep.subr.bf16.mxu0 0
        %1399 = vmatpush1.bf16.msra.mxu0 0
        %1400 = vmatprep.subr.bf16.mxu0 0
        %1401 = vmatpush1.bf16.msra.mxu0 0
        %1402 = vmatprep.subr.bf16.mxu0 0
        %1403 = vmatpush1.bf16.msra.mxu0 0
        %1404 = vmatprep.subr.bf16.mxu0 0
        %1405 = vmatpush1.bf16.msra.mxu0 0
        %1406 = vmatprep.subr.bf16.mxu0 0
        %1407 = vmatpush1.bf16.msra.mxu0 0
        %1408 = vmatprep.subr.bf16.mxu0 0
        %1409 = vmatpush1.bf16.msra.mxu0 0
        %1410 = vmatprep.subr.bf16.mxu0 0
        %1411 = vmatpush1.bf16.msra.mxu0 0
        %1412 = vmatprep.subr.bf16.mxu0 0
        %1413 = vmatpush1.bf16.msra.mxu0 0
        %1414 = vmatprep.subr.bf16.mxu0 0
        %1415 = vmatpush1.bf16.msra.mxu0 0
        %1416 = vmatprep.subr.bf16.mxu0 0
        %1417 = vmatpush1.bf16.msra.mxu0 0
        %1418 = vmatprep.subr.bf16.mxu0 0
        %1419 = vmatpush1.bf16.msra.mxu0 0
        %1420 = vmatprep.subr.bf16.mxu0 0
        %1421 = vmatpush1.bf16.msra.mxu0 0
        %1422 = vmatprep.subr.bf16.mxu0 0
        %1423 = vmatpush1.bf16.msra.mxu0 0
        %1424 = vmatprep.subr.bf16.mxu0 0
        %1425 = vmatpush1.bf16.msra.mxu0 0
        %1426 = vmatprep.subr.bf16.mxu0 0
        %1427 = vmatpush1.bf16.msra.mxu0 0
        %1428 = vmatprep.mubr.bf16.mxu0 0
        %1429 = vmatmul.mubr.bf16.gmra.mrb[0].mxu0 %v1114
        %v1430 = vpop.f32.mrb[0].mxu0
        %v1431 = vadd.f32 0.0, %v1430
        %v1432 = vpop.f32.mrb[0].mxu0
        %v1433 = vpop.f32.mrb[0].mxu0
        %v1434 = vpop.f32.mrb[0].mxu0
        %1435 = vdwg.mxu0
        %1436 = vmatprep.subr.bf16.mxu0 0
        %1437 = vmatpush1.bf16.msra.mxu0 %v1101
        %1438 = vmatprep.subr.bf16.mxu0 0
        %1439 = vmatpush1.bf16.msra.mxu0 0
        %1440 = vmatprep.subr.bf16.mxu0 0
        %1441 = vmatpush1.bf16.msra.mxu0 0
        %1442 = vmatprep.subr.bf16.mxu0 0
        %1443 = vmatpush1.bf16.msra.mxu0 0
        %1444 = vmatprep.subr.bf16.mxu0 0
        %1445 = vmatpush1.bf16.msra.mxu0 0
        %1446 = vmatprep.subr.bf16.mxu0 0
        %1447 = vmatpush1.bf16.msra.mxu0 0
        %1448 = vmatprep.subr.bf16.mxu0 0
        %1449 = vmatpush1.bf16.msra.mxu0 0
        %1450 = vmatprep.subr.bf16.mxu0 0
        %1451 = vmatpush1.bf16.msra.mxu0 0
        %1452 = vmatprep.subr.bf16.mxu0 0
        %1453 = vmatpush1.bf16.msra.mxu0 0
        %1454 = vmatprep.subr.bf16.mxu0 0
        %1455 = vmatpush1.bf16.msra.mxu0 0
        %1456 = vmatprep.subr.bf16.mxu0 0
        %1457 = vmatpush1.bf16.msra.mxu0 0
        %1458 = vmatprep.subr.bf16.mxu0 0
        %1459 = vmatpush1.bf16.msra.mxu0 0
        %1460 = vmatprep.subr.bf16.mxu0 0
        %1461 = vmatpush1.bf16.msra.mxu0 0
        %1462 = vmatprep.subr.bf16.mxu0 0
        %1463 = vmatpush1.bf16.msra.mxu0 0
        %1464 = vmatprep.subr.bf16.mxu0 0
        %1465 = vmatpush1.bf16.msra.mxu0 0
        %1466 = vmatprep.subr.bf16.mxu0 0
        %1467 = vmatpush1.bf16.msra.mxu0 0
        %1468 = vmatprep.mubr.bf16.mxu0 0
        %1469 = vmatmul.mubr.bf16.gmra.mrb[0].mxu0 %v1114
        %v1470 = vpop.f32.mrb[0].mxu0
        %v1471 = vadd.f32 0.0, %v1470
        %v1472 = vpop.f32.mrb[0].mxu0
        %v1473 = vpop.f32.mrb[0].mxu0
        %v1474 = vpop.f32.mrb[0].mxu0
        %1475 = vdwg.mxu0
        %1476 = vmatprep.subr.bf16.mxu0 0
        %1477 = vmatpush1.bf16.msra.mxu0 %v1102
        %1478 = vmatprep.subr.bf16.mxu0 0
        %1479 = vmatpush1.bf16.msra.mxu0 0
        %1480 = vmatprep.subr.bf16.mxu0 0
        %1481 = vmatpush1.bf16.msra.mxu0 0
        %1482 = vmatprep.subr.bf16.mxu0 0
        %1483 = vmatpush1.bf16.msra.mxu0 0
        %1484 = vmatprep.subr.bf16.mxu0 0
        %1485 = vmatpush1.bf16.msra.mxu0 0
        %1486 = vmatprep.subr.bf16.mxu0 0
        %1487 = vmatpush1.bf16.msra.mxu0 0
        %1488 = vmatprep.subr.bf16.mxu0 0
        %1489 = vmatpush1.bf16.msra.mxu0 0
        %1490 = vmatprep.subr.bf16.mxu0 0
        %1491 = vmatpush1.bf16.msra.mxu0 0
        %1492 = vmatprep.subr.bf16.mxu0 0
        %1493 = vmatpush1.bf16.msra.mxu0 0
        %1494 = vmatprep.subr.bf16.mxu0 0
        %1495 = vmatpush1.bf16.msra.mxu0 0
        %1496 = vmatprep.subr.bf16.mxu0 0
        %1497 = vmatpush1.bf16.msra.mxu0 0
        %1498 = vmatprep.subr.bf16.mxu0 0
        %1499 = vmatpush1.bf16.msra.mxu0 0
        %1500 = vmatprep.subr.bf16.mxu0 0
        %1501 = vmatpush1.bf16.msra.mxu0 0
        %1502 = vmatprep.subr.bf16.mxu0 0
        %1503 = vmatpush1.bf16.msra.mxu0 0
        %1504 = vmatprep.subr.bf16.mxu0 0
        %1505 = vmatpush1.bf16.msra.mxu0 0
        %1506 = vmatprep.subr.bf16.mxu0 0
        %1507 = vmatpush1.bf16.msra.mxu0 0
        %1508 = vmatprep.mubr.bf16.mxu0 0
        %1509 = vmatmul.mubr.bf16.gmra.mrb[0].mxu0 %v1114
        %v1510 = vpop.f32.mrb[0].mxu0
        %v1511 = vadd.f32 0.0, %v1510
        %v1512 = vpop.f32.mrb[0].mxu0
        %v1513 = vpop.f32.mrb[0].mxu0
        %v1514 = vpop.f32.mrb[0].mxu0
        %1515 = vdwg.mxu0
        %1516 = vmatprep.subr.bf16.mxu0 0
        %1517 = vmatpush1.bf16.msra.mxu0 %v1103
        %1518 = vmatprep.subr.bf16.mxu0 0
        %1519 = vmatpush1.bf16.msra.mxu0 0
        %1520 = vmatprep.subr.bf16.mxu0 0
        %1521 = vmatpush1.bf16.msra.mxu0 0
        %1522 = vmatprep.subr.bf16.mxu0 0
        %1523 = vmatpush1.bf16.msra.mxu0 0
        %1524 = vmatprep.subr.bf16.mxu0 0
        %1525 = vmatpush1.bf16.msra.mxu0 0
        %1526 = vmatprep.subr.bf16.mxu0 0
        %1527 = vmatpush1.bf16.msra.mxu0 0
        %1528 = vmatprep.subr.bf16.mxu0 0
        %1529 = vmatpush1.bf16.msra.mxu0 0
        %1530 = vmatprep.subr.bf16.mxu0 0
        %1531 = vmatpush1.bf16.msra.mxu0 0
        %1532 = vmatprep.subr.bf16.mxu0 0
        %1533 = vmatpush1.bf16.msra.mxu0 0
        %1534 = vmatprep.subr.bf16.mxu0 0
        %1535 = vmatpush1.bf16.msra.mxu0 0
        %1536 = vmatprep.subr.bf16.mxu0 0
        %1537 = vmatpush1.bf16.msra.mxu0 0
        %1538 = vmatprep.subr.bf16.mxu0 0
        %1539 = vmatpush1.bf16.msra.mxu0 0
        %1540 = vmatprep.subr.bf16.mxu0 0
        %1541 = vmatpush1.bf16.msra.mxu0 0
        %1542 = vmatprep.subr.bf16.mxu0 0
        %1543 = vmatpush1.bf16.msra.mxu0 0
        %1544 = vmatprep.subr.bf16.mxu0 0
        %1545 = vmatpush1.bf16.msra.mxu0 0
        %1546 = vmatprep.subr.bf16.mxu0 0
        %1547 = vmatpush1.bf16.msra.mxu0 0
        %1548 = vmatprep.mubr.bf16.mxu0 0
        %1549 = vmatmul.mubr.bf16.gmra.mrb[0].mxu0 %v1114
        %v1550 = vpop.f32.mrb[0].mxu0
        %v1551 = vadd.f32 0.0, %v1550
        %v1552 = vpop.f32.mrb[0].mxu0
        %v1553 = vpop.f32.mrb[0].mxu0
        %v1554 = vpop.f32.mrb[0].mxu0
        %1555 = vdwg.mxu0
        %1556 = vmatprep.subr.bf16.mxu0 0
        %1557 = vmatpush1.bf16.msra.mxu0 %v1104
        %1558 = vmatprep.subr.bf16.mxu0 0
        %1559 = vmatpush1.bf16.msra.mxu0 0
        %1560 = vmatprep.subr.bf16.mxu0 0
        %1561 = vmatpush1.bf16.msra.mxu0 0
        %1562 = vmatprep.subr.bf16.mxu0 0
        %1563 = vmatpush1.bf16.msra.mxu0 0
        %1564 = vmatprep.subr.bf16.mxu0 0
        %1565 = vmatpush1.bf16.msra.mxu0 0
        %1566 = vmatprep.subr.bf16.mxu0 0
        %1567 = vmatpush1.bf16.msra.mxu0 0
        %1568 = vmatprep.subr.bf16.mxu0 0
        %1569 = vmatpush1.bf16.msra.mxu0 0
        %1570 = vmatprep.subr.bf16.mxu0 0
        %1571 = vmatpush1.bf16.msra.mxu0 0
        %1572 = vmatprep.subr.bf16.mxu0 0
        %1573 = vmatpush1.bf16.msra.mxu0 0
        %1574 = vmatprep.subr.bf16.mxu0 0
        %1575 = vmatpush1.bf16.msra.mxu0 0
        %1576 = vmatprep.subr.bf16.mxu0 0
        %1577 = vmatpush1.bf16.msra.mxu0 0
        %1578 = vmatprep.subr.bf16.mxu0 0
        %1579 = vmatpush1.bf16.msra.mxu0 0
        %1580 = vmatprep.subr.bf16.mxu0 0
        %1581 = vmatpush1.bf16.msra.mxu0 0
        %1582 = vmatprep.subr.bf16.mxu0 0
        %1583 = vmatpush1.bf16.msra.mxu0 0
        %1584 = vmatprep.subr.bf16.mxu0 0
        %1585 = vmatpush1.bf16.msra.mxu0 0
        %1586 = vmatprep.subr.bf16.mxu0 0
        %1587 = vmatpush1.bf16.msra.mxu0 0
        %1588 = vmatprep.mubr.bf16.mxu0 0
        %1589 = vmatmul.mubr.bf16.gmra.mrb[0].mxu0 %v1114
        %v1590 = vpop.f32.mrb[0].mxu0
        %v1591 = vadd.f32 0.0, %v1590
        %v1592 = vpop.f32.mrb[0].mxu0
        %v1593 = vpop.f32.mrb[0].mxu0
        %v1594 = vpop.f32.mrb[0].mxu0
        %1595 = vdwg.mxu0
        %1596 = vmatprep.subr.bf16.mxu0 0
        %1597 = vmatpush1.bf16.msra.mxu0 %v1105
        %1598 = vmatprep.subr.bf16.mxu0 0
        %1599 = vmatpush1.bf16.msra.mxu0 0
        %1600 = vmatprep.subr.bf16.mxu0 0
        %1601 = vmatpush1.bf16.msra.mxu0 0
        %1602 = vmatprep.subr.bf16.mxu0 0
        %1603 = vmatpush1.bf16.msra.mxu0 0
        %1604 = vmatprep.subr.bf16.mxu0 0
        %1605 = vmatpush1.bf16.msra.mxu0 0
        %1606 = vmatprep.subr.bf16.mxu0 0
        %1607 = vmatpush1.bf16.msra.mxu0 0
        %1608 = vmatprep.subr.bf16.mxu0 0
        %1609 = vmatpush1.bf16.msra.mxu0 0
        %1610 = vmatprep.subr.bf16.mxu0 0
        %1611 = vmatpush1.bf16.msra.mxu0 0
        %1612 = vmatprep.subr.bf16.mxu0 0
        %1613 = vmatpush1.bf16.msra.mxu0 0
        %1614 = vmatprep.subr.bf16.mxu0 0
        %1615 = vmatpush1.bf16.msra.mxu0 0
        %1616 = vmatprep.subr.bf16.mxu0 0
        %1617 = vmatpush1.bf16.msra.mxu0 0
        %1618 = vmatprep.subr.bf16.mxu0 0
        %1619 = vmatpush1.bf16.msra.mxu0 0
        %1620 = vmatprep.subr.bf16.mxu0 0
        %1621 = vmatpush1.bf16.msra.mxu0 0
        %1622 = vmatprep.subr.bf16.mxu0 0
        %1623 = vmatpush1.bf16.msra.mxu0 0
        %1624 = vmatprep.subr.bf16.mxu0 0
        %1625 = vmatpush1.bf16.msra.mxu0 0
        %1626 = vmatprep.subr.bf16.mxu0 0
        %1627 = vmatpush1.bf16.msra.mxu0 0
        %1628 = vmatprep.mubr.bf16.mxu0 0
        %1629 = vmatmul.mubr.bf16.gmra.mrb[0].mxu0 %v1114
        %v1630 = vpop.f32.mrb[0].mxu0
        %v1631 = vadd.f32 0.0, %v1630
        %v1632 = vpop.f32.mrb[0].mxu0
        %v1633 = vpop.f32.mrb[0].mxu0
        %v1634 = vpop.f32.mrb[0].mxu0
        %1635 = vdwg.mxu0
        %1636 = vmatprep.subr.bf16.mxu0 0
        %1637 = vmatpush1.bf16.msra.mxu0 %v1106
        %1638 = vmatprep.subr.bf16.mxu0 0
        %1639 = vmatpush1.bf16.msra.mxu0 0
        %1640 = vmatprep.subr.bf16.mxu0 0
        %1641 = vmatpush1.bf16.msra.mxu0 0
        %1642 = vmatprep.subr.bf16.mxu0 0
        %1643 = vmatpush1.bf16.msra.mxu0 0
        %1644 = vmatprep.subr.bf16.mxu0 0
        %1645 = vmatpush1.bf16.msra.mxu0 0
        %1646 = vmatprep.subr.bf16.mxu0 0
        %1647 = vmatpush1.bf16.msra.mxu0 0
        %1648 = vmatprep.subr.bf16.mxu0 0
        %1649 = vmatpush1.bf16.msra.mxu0 0
        %1650 = vmatprep.subr.bf16.mxu0 0
        %1651 = vmatpush1.bf16.msra.mxu0 0
        %1652 = vmatprep.subr.bf16.mxu0 0
        %1653 = vmatpush1.bf16.msra.mxu0 0
        %1654 = vmatprep.subr.bf16.mxu0 0
        %1655 = vmatpush1.bf16.msra.mxu0 0
        %1656 = vmatprep.subr.bf16.mxu0 0
        %1657 = vmatpush1.bf16.msra.mxu0 0
        %1658 = vmatprep.subr.bf16.mxu0 0
        %1659 = vmatpush1.bf16.msra.mxu0 0
        %1660 = vmatprep.subr.bf16.mxu0 0
        %1661 = vmatpush1.bf16.msra.mxu0 0
        %1662 = vmatprep.subr.bf16.mxu0 0
        %1663 = vmatpush1.bf16.msra.mxu0 0
        %1664 = vmatprep.subr.bf16.mxu0 0
        %1665 = vmatpush1.bf16.msra.mxu0 0
        %1666 = vmatprep.subr.bf16.mxu0 0
        %1667 = vmatpush1.bf16.msra.mxu0 0
        %1668 = vmatprep.mubr.bf16.mxu0 0
        %1669 = vmatmul.mubr.bf16.gmra.mrb[0].mxu0 %v1114
        %v1670 = vpop.f32.mrb[0].mxu0
        %v1671 = vadd.f32 0.0, %v1670
        %v1672 = vpop.f32.mrb[0].mxu0
        %v1673 = vpop.f32.mrb[0].mxu0
        %v1674 = vpop.f32.mrb[0].mxu0
        %1675 = vdwg.mxu0
        %1676 = vmatprep.subr.bf16.mxu0 0
        %1677 = vmatpush1.bf16.msra.mxu0 %v1107
        %1678 = vmatprep.subr.bf16.mxu0 0
        %1679 = vmatpush1.bf16.msra.mxu0 0
        %1680 = vmatprep.subr.bf16.mxu0 0
        %1681 = vmatpush1.bf16.msra.mxu0 0
        %1682 = vmatprep.subr.bf16.mxu0 0
        %1683 = vmatpush1.bf16.msra.mxu0 0
        %1684 = vmatprep.subr.bf16.mxu0 0
        %1685 = vmatpush1.bf16.msra.mxu0 0
        %1686 = vmatprep.subr.bf16.mxu0 0
        %1687 = vmatpush1.bf16.msra.mxu0 0
        %1688 = vmatprep.subr.bf16.mxu0 0
        %1689 = vmatpush1.bf16.msra.mxu0 0
        %1690 = vmatprep.subr.bf16.mxu0 0
        %1691 = vmatpush1.bf16.msra.mxu0 0
        %1692 = vmatprep.subr.bf16.mxu0 0
        %1693 = vmatpush1.bf16.msra.mxu0 0
        %1694 = vmatprep.subr.bf16.mxu0 0
        %1695 = vmatpush1.bf16.msra.mxu0 0
        %1696 = vmatprep.subr.bf16.mxu0 0
        %1697 = vmatpush1.bf16.msra.mxu0 0
        %1698 = vmatprep.subr.bf16.mxu0 0
        %1699 = vmatpush1.bf16.msra.mxu0 0
        %1700 = vmatprep.subr.bf16.mxu0 0
        %1701 = vmatpush1.bf16.msra.mxu0 0
        %1702 = vmatprep.subr.bf16.mxu0 0
        %1703 = vmatpush1.bf16.msra.mxu0 0
        %1704 = vmatprep.subr.bf16.mxu0 0
        %1705 = vmatpush1.bf16.msra.mxu0 0
        %1706 = vmatprep.subr.bf16.mxu0 0
        %1707 = vmatpush1.bf16.msra.mxu0 0
        %1708 = vmatprep.mubr.bf16.mxu0 0
        %1709 = vmatmul.mubr.bf16.gmra.mrb[0].mxu0 %v1114
        %v1710 = vpop.f32.mrb[0].mxu0
        %v1711 = vadd.f32 0.0, %v1710
        %v1712 = vpop.f32.mrb[0].mxu0
        %v1713 = vpop.f32.mrb[0].mxu0
        %v1714 = vpop.f32.mrb[0].mxu0
        %1715 = vdwg.mxu0
        %1716 = vmatprep.subr.bf16.mxu0 0
        %1717 = vmatpush1.bf16.msra.mxu0 %v1108
        %1718 = vmatprep.subr.bf16.mxu0 0
        %1719 = vmatpush1.bf16.msra.mxu0 0
        %1720 = vmatprep.subr.bf16.mxu0 0
        %1721 = vmatpush1.bf16.msra.mxu0 0
        %1722 = vmatprep.subr.bf16.mxu0 0
        %1723 = vmatpush1.bf16.msra.mxu0 0
        %1724 = vmatprep.subr.bf16.mxu0 0
        %1725 = vmatpush1.bf16.msra.mxu0 0
        %1726 = vmatprep.subr.bf16.mxu0 0
        %1727 = vmatpush1.bf16.msra.mxu0 0
        %1728 = vmatprep.subr.bf16.mxu0 0
        %1729 = vmatpush1.bf16.msra.mxu0 0
        %1730 = vmatprep.subr.bf16.mxu0 0
        %1731 = vmatpush1.bf16.msra.mxu0 0
        %1732 = vmatprep.subr.bf16.mxu0 0
        %1733 = vmatpush1.bf16.msra.mxu0 0
        %1734 = vmatprep.subr.bf16.mxu0 0
        %1735 = vmatpush1.bf16.msra.mxu0 0
        %1736 = vmatprep.subr.bf16.mxu0 0
        %1737 = vmatpush1.bf16.msra.mxu0 0
        %1738 = vmatprep.subr.bf16.mxu0 0
        %1739 = vmatpush1.bf16.msra.mxu0 0
        %1740 = vmatprep.subr.bf16.mxu0 0
        %1741 = vmatpush1.bf16.msra.mxu0 0
        %1742 = vmatprep.subr.bf16.mxu0 0
        %1743 = vmatpush1.bf16.msra.mxu0 0
        %1744 = vmatprep.subr.bf16.mxu0 0
        %1745 = vmatpush1.bf16.msra.mxu0 0
        %1746 = vmatprep.subr.bf16.mxu0 0
        %1747 = vmatpush1.bf16.msra.mxu0 0
        %1748 = vmatprep.mubr.bf16.mxu0 0
        %1749 = vmatmul.mubr.bf16.gmra.mrb[0].mxu0 %v1114
        %v1750 = vpop.f32.mrb[0].mxu0
        %v1751 = vadd.f32 0.0, %v1750
        %v1752 = vpop.f32.mrb[0].mxu0
        %v1753 = vpop.f32.mrb[0].mxu0
        %v1754 = vpop.f32.mrb[0].mxu0
        %1755 = vdwg.mxu0
        %1756 = vmatprep.subr.bf16.mxu0 0
        %1757 = vmatpush1.bf16.msra.mxu0 %v1109
        %1758 = vmatprep.subr.bf16.mxu0 0
        %1759 = vmatpush1.bf16.msra.mxu0 0
        %1760 = vmatprep.subr.bf16.mxu0 0
        %1761 = vmatpush1.bf16.msra.mxu0 0
        %1762 = vmatprep.subr.bf16.mxu0 0
        %1763 = vmatpush1.bf16.msra.mxu0 0
        %1764 = vmatprep.subr.bf16.mxu0 0
        %1765 = vmatpush1.bf16.msra.mxu0 0
        %1766 = vmatprep.subr.bf16.mxu0 0
        %1767 = vmatpush1.bf16.msra.mxu0 0
        %1768 = vmatprep.subr.bf16.mxu0 0
        %1769 = vmatpush1.bf16.msra.mxu0 0
        %1770 = vmatprep.subr.bf16.mxu0 0
        %1771 = vmatpush1.bf16.msra.mxu0 0
        %1772 = vmatprep.subr.bf16.mxu0 0
        %1773 = vmatpush1.bf16.msra.mxu0 0
        %1774 = vmatprep.subr.bf16.mxu0 0
        %1775 = vmatpush1.bf16.msra.mxu0 0
        %1776 = vmatprep.subr.bf16.mxu0 0
        %1777 = vmatpush1.bf16.msra.mxu0 0
        %1778 = vmatprep.subr.bf16.mxu0 0
        %1779 = vmatpush1.bf16.msra.mxu0 0
        %1780 = vmatprep.subr.bf16.mxu0 0
        %1781 = vmatpush1.bf16.msra.mxu0 0
        %1782 = vmatprep.subr.bf16.mxu0 0
        %1783 = vmatpush1.bf16.msra.mxu0 0
        %1784 = vmatprep.subr.bf16.mxu0 0
        %1785 = vmatpush1.bf16.msra.mxu0 0
        %1786 = vmatprep.subr.bf16.mxu0 0
        %1787 = vmatpush1.bf16.msra.mxu0 0
        %1788 = vmatprep.mubr.bf16.mxu0 0
        %1789 = vmatmul.mubr.bf16.gmra.mrb[0].mxu0 %v1114
        %v1790 = vpop.f32.mrb[0].mxu0
        %v1791 = vadd.f32 0.0, %v1790
        %v1792 = vpop.f32.mrb[0].mxu0
        %v1793 = vpop.f32.mrb[0].mxu0
        %v1794 = vpop.f32.mrb[0].mxu0
        %1795 = vdwg.mxu0
        %1796 = vmatprep.subr.bf16.mxu0 0
        %1797 = vmatpush1.bf16.msra.mxu0 %v1110
        %1798 = vmatprep.subr.bf16.mxu0 0
        %1799 = vmatpush1.bf16.msra.mxu0 0
        %1800 = vmatprep.subr.bf16.mxu0 0
        %1801 = vmatpush1.bf16.msra.mxu0 0
        %1802 = vmatprep.subr.bf16.mxu0 0
        %1803 = vmatpush1.bf16.msra.mxu0 0
        %1804 = vmatprep.subr.bf16.mxu0 0
        %1805 = vmatpush1.bf16.msra.mxu0 0
        %1806 = vmatprep.subr.bf16.mxu0 0
        %1807 = vmatpush1.bf16.msra.mxu0 0
        %1808 = vmatprep.subr.bf16.mxu0 0
        %1809 = vmatpush1.bf16.msra.mxu0 0
        %1810 = vmatprep.subr.bf16.mxu0 0
        %1811 = vmatpush1.bf16.msra.mxu0 0
        %1812 = vmatprep.subr.bf16.mxu0 0
        %1813 = vmatpush1.bf16.msra.mxu0 0
        %1814 = vmatprep.subr.bf16.mxu0 0
        %1815 = vmatpush1.bf16.msra.mxu0 0
        %1816 = vmatprep.subr.bf16.mxu0 0
        %1817 = vmatpush1.bf16.msra.mxu0 0
        %1818 = vmatprep.subr.bf16.mxu0 0
        %1819 = vmatpush1.bf16.msra.mxu0 0
        %1820 = vmatprep.subr.bf16.mxu0 0
        %1821 = vmatpush1.bf16.msra.mxu0 0
        %1822 = vmatprep.subr.bf16.mxu0 0
        %1823 = vmatpush1.bf16.msra.mxu0 0
        %1824 = vmatprep.subr.bf16.mxu0 0
        %1825 = vmatpush1.bf16.msra.mxu0 0
        %1826 = vmatprep.subr.bf16.mxu0 0
        %1827 = vmatpush1.bf16.msra.mxu0 0
        %1828 = vmatprep.mubr.bf16.mxu0 0
        %1829 = vmatmul.mubr.bf16.gmra.mrb[0].mxu0 %v1114
        %v1830 = vpop.f32.mrb[0].mxu0
        %v1831 = vadd.f32 0.0, %v1830
        %v1832 = vpop.f32.mrb[0].mxu0
        %v1833 = vpop.f32.mrb[0].mxu0
        %v1834 = vpop.f32.mrb[0].mxu0
        %1835 = vdwg.mxu0
        %1836 = vmatprep.subr.bf16.mxu0 0
        %1837 = vmatpush1.bf16.msra.mxu0 %v1111
        %1838 = vmatprep.subr.bf16.mxu0 0
        %1839 = vmatpush1.bf16.msra.mxu0 0
        %1840 = vmatprep.subr.bf16.mxu0 0
        %1841 = vmatpush1.bf16.msra.mxu0 0
        %1842 = vmatprep.subr.bf16.mxu0 0
        %1843 = vmatpush1.bf16.msra.mxu0 0
        %1844 = vmatprep.subr.bf16.mxu0 0
        %1845 = vmatpush1.bf16.msra.mxu0 0
        %1846 = vmatprep.subr.bf16.mxu0 0
        %1847 = vmatpush1.bf16.msra.mxu0 0
        %1848 = vmatprep.subr.bf16.mxu0 0
        %1849 = vmatpush1.bf16.msra.mxu0 0
        %1850 = vmatprep.subr.bf16.mxu0 0
        %1851 = vmatpush1.bf16.msra.mxu0 0
        %1852 = vmatprep.subr.bf16.mxu0 0
        %1853 = vmatpush1.bf16.msra.mxu0 0
        %1854 = vmatprep.subr.bf16.mxu0 0
        %1855 = vmatpush1.bf16.msra.mxu0 0
        %1856 = vmatprep.subr.bf16.mxu0 0
        %1857 = vmatpush1.bf16.msra.mxu0 0
        %1858 = vmatprep.subr.bf16.mxu0 0
        %1859 = vmatpush1.bf16.msra.mxu0 0
        %1860 = vmatprep.subr.bf16.mxu0 0
        %1861 = vmatpush1.bf16.msra.mxu0 0
        %1862 = vmatprep.subr.bf16.mxu0 0
        %1863 = vmatpush1.bf16.msra.mxu0 0
        %1864 = vmatprep.subr.bf16.mxu0 0
        %1865 = vmatpush1.bf16.msra.mxu0 0
        %1866 = vmatprep.subr.bf16.mxu0 0
        %1867 = vmatpush1.bf16.msra.mxu0 0
        %1868 = vmatprep.mubr.bf16.mxu0 0
        %1869 = vmatmul.mubr.bf16.gmra.mrb[0].mxu0 %v1114
        %v1870 = vpop.f32.mrb[0].mxu0
        %v1871 = vadd.f32 0.0, %v1870
        %v1872 = vpop.f32.mrb[0].mxu0
        %v1873 = vpop.f32.mrb[0].mxu0
        %v1874 = vpop.f32.mrb[0].mxu0
        %1875 = vdwg.mxu0
        %1876 = vmatprep.subr.bf16.mxu0 0
        %1877 = vmatpush1.bf16.msra.mxu0 %v1112
        %1878 = vmatprep.subr.bf16.mxu0 0
        %1879 = vmatpush1.bf16.msra.mxu0 0
        %1880 = vmatprep.subr.bf16.mxu0 0
        %1881 = vmatpush1.bf16.msra.mxu0 0
        %1882 = vmatprep.subr.bf16.mxu0 0
        %1883 = vmatpush1.bf16.msra.mxu0 0
        %1884 = vmatprep.subr.bf16.mxu0 0
        %1885 = vmatpush1.bf16.msra.mxu0 0
        %1886 = vmatprep.subr.bf16.mxu0 0
        %1887 = vmatpush1.bf16.msra.mxu0 0
        %1888 = vmatprep.subr.bf16.mxu0 0
        %1889 = vmatpush1.bf16.msra.mxu0 0
        %1890 = vmatprep.subr.bf16.mxu0 0
        %1891 = vmatpush1.bf16.msra.mxu0 0
        %1892 = vmatprep.subr.bf16.mxu0 0
        %1893 = vmatpush1.bf16.msra.mxu0 0
        %1894 = vmatprep.subr.bf16.mxu0 0
        %1895 = vmatpush1.bf16.msra.mxu0 0
        %1896 = vmatprep.subr.bf16.mxu0 0
        %1897 = vmatpush1.bf16.msra.mxu0 0
        %1898 = vmatprep.subr.bf16.mxu0 0
        %1899 = vmatpush1.bf16.msra.mxu0 0
        %1900 = vmatprep.subr.bf16.mxu0 0
        %1901 = vmatpush1.bf16.msra.mxu0 0
        %1902 = vmatprep.subr.bf16.mxu0 0
        %1903 = vmatpush1.bf16.msra.mxu0 0
        %1904 = vmatprep.subr.bf16.mxu0 0
        %1905 = vmatpush1.bf16.msra.mxu0 0
        %1906 = vmatprep.subr.bf16.mxu0 0
        %1907 = vmatpush1.bf16.msra.mxu0 0
        %1908 = vmatprep.mubr.bf16.mxu0 0
        %1909 = vmatmul.mubr.bf16.gmra.mrb[0].mxu0 %v1114
        %v1910 = vpop.f32.mrb[0].mxu0
        %v1911 = vadd.f32 0.0, %v1910
        %v1912 = vpop.f32.mrb[0].mxu0
        %v1913 = vpop.f32.mrb[0].mxu0
        %v1914 = vpop.f32.mrb[0].mxu0
        %1915 = vdwg.mxu0
        %v1916 = vmul.f32 %v1151, %v1151
        %v1917 = vmul.f32 %v1191, %v1191
        %v1918 = vmul.f32 %v1231, %v1231
        %v1919 = vmul.f32 %v1271, %v1271
        %v1920 = vmul.f32 %v1311, %v1311
        %v1921 = vmul.f32 %v1351, %v1351
        %v1922 = vmul.f32 %v1391, %v1391
        %v1923 = vmul.f32 %v1431, %v1431
        %v1924 = vmul.f32 %v1151, %v1311
        %v1925 = vmul.f32 %v1191, %v1351
        %v1926 = vmul.f32 %v1231, %v1391
        %v1927 = vmul.f32 %v1271, %v1431
        %v1928 = vsub.f32 %v1471, %v1916
        %v1929 = vsub.f32 %v1511, %v1917
        %v1930 = vsub.f32 %v1551, %v1918
        %v1931 = vsub.f32 %v1591, %v1919
        %v1932 = vsub.f32 %v1631, %v1920
        %v1933 = vsub.f32 %v1671, %v1921
        %v1934 = vsub.f32 %v1711, %v1922
        %v1935 = vsub.f32 %v1751, %v1923
        %v1936 = vsub.f32 %v1791, %v1924
        %v1937 = vsub.f32 %v1831, %v1925
        %v1938 = vsub.f32 %v1871, %v1926
        %v1939 = vsub.f32 %v1911, %v1927
        %v1940 = vadd.f32 %v1928, %v1932
        %v1941 = vadd.f32 %v1929, %v1933
        %v1942 = vadd.f32 %v1930, %v1934
        %v1943 = vadd.f32 %v1931, %v1935
        %v1944 = vmax.f32 %v1940, 0.0
        %v1945 = vmax.f32 %v1941, 0.0
        %v1946 = vmax.f32 %v1942, 0.0
        %v1947 = vmax.f32 %v1943, 0.0
        %v1948 = vadd.f32 %v1944, 0.0009
        %v1949 = vadd.f32 %v1945, 0.0009
        %v1950 = vadd.f32 %v1946, 0.0009
        %v1951 = vadd.f32 %v1947, 0.0009
        %v1952 = vmul.f32 %v1936, 2.0
        %v1953 = vmul.f32 %v1937, 2.0
        %v1954 = vmul.f32 %v1938, 2.0
        %v1955 = vmul.f32 %v1939, 2.0
        %v1956 = vadd.f32 %v1952, 0.0009
        %v1957 = vadd.f32 %v1953, 0.0009
        %v1958 = vadd.f32 %v1954, 0.0009
        %v1959 = vadd.f32 %v1955, 0.0009
        %v1960 = vrcp.pop %v1948
        %v1961 = vrcp.pop %v1949
        %v1962 = vrcp.pop %v1950
        %v1963 = vrcp.pop %v1951
        %v1964 = vmul.f32 %v1948, %v1960
        %v1965 = vmul.f32 %v1949, %v1961
        %v1966 = vmul.f32 %v1950, %v1962
        %v1967 = vmul.f32 %v1951, %v1963
        %v1968 = vsub.f32 2.0, %v1964
        %v1969 = vsub.f32 2.0, %v1965
        %v1970 = vsub.f32 2.0, %v1966
        %v1971 = vsub.f32 2.0, %v1967
        %v1972 = vmul.f32 %v1960, %v1968
        %v1973 = vmul.f32 %v1961, %v1969
        %v1974 = vmul.f32 %v1962, %v1970
        %v1975 = vmul.f32 %v1963, %v1971
        %v1976 = vmul.f32 %v1956, %v1972
        %v1977 = vmul.f32 %v1957, %v1973
        %v1978 = vmul.f32 %v1958, %v1974
        %v1979 = vmul.f32 %v1959, %v1975
        %v1980 = vmul.f32 %v1924, 2.0
        %v1981 = vmul.f32 %v1925, 2.0
        %v1982 = vmul.f32 %v1926, 2.0
        %v1983 = vmul.f32 %v1927, 2.0
        %v1984 = vadd.f32 %v1980, 0.0001
        %v1985 = vadd.f32 %v1981, 0.0001
        %v1986 = vadd.f32 %v1982, 0.0001
        %v1987 = vadd.f32 %v1983, 0.0001
        %v1988 = vadd.f32 %v1916, %v1920
        %v1989 = vadd.f32 %v1917, %v1921
        %v1990 = vadd.f32 %v1918, %v1922
        %v1991 = vadd.f32 %v1919, %v1923
        %v1992 = vadd.f32 %v1988, 0.0001
        %v1993 = vadd.f32 %v1989, 0.0001
        %v1994 = vadd.f32 %v1990, 0.0001
        %v1995 = vadd.f32 %v1991, 0.0001
        %v1996 = vrcp.pop %v1992
        %v1997 = vrcp.pop %v1993
        %v1998 = vrcp.pop %v1994
        %v1999 = vrcp.pop %v1995
        %v2000 = vmul.f32 %v1992, %v1996
        %v2001 = vmul.f32 %v1993, %v1997
        %v2002 = vmul.f32 %v1994, %v1998
        %v2003 = vmul.f32 %v1995, %v1999
        %v2004 = vsub.f32 2.0, %v2000
        %v2005 = vsub.f32 2.0, %v2001
        %v2006 = vsub.f32 2.0, %v2002
        %v2007 = vsub.f32 2.0, %v2003
        %v2008 = vmul.f32 %v1996, %v2004
        %v2009 = vmul.f32 %v1997, %v2005
        %v2010 = vmul.f32 %v1998, %v2006
        %v2011 = vmul.f32 %v1999, %v2007
        %v2012 = vmul.f32 %v1984, %v2008
        %v2013 = vmul.f32 %v1985, %v2009
        %v2014 = vmul.f32 %v1986, %v2010
        %v2015 = vmul.f32 %v1987, %v2011
        %v2016 = vmul.f32 %v2012, %v1976
        %v2017 = vmul.f32 %v2013, %v1977
        %v2018 = vmul.f32 %v2014, %v1978
        %v2019 = vmul.f32 %v2015, %v1979
        %vm2020 = vcmask 46080
        %v2021 = vsel %vm2020, %v2016, 0.0
        %v2022 = vsel %vm2020, %v2017, 0.0
        %v2023 = vadd.f32 %v2021, %v2022
        %v2024 = vsel %vm2020, %v2018, 0.0
        %v2025 = vadd.f32 %v2023, %v2024
        %v2026 = vsel %vm2020, %v2019, 0.0
        %v2027 = vadd.f32 %v2025, %v2026
        %2028 = vadd.xlane.f32.xlu0 %v2027
        %v2029 = vpop.xlane.xlu0 %2028
        %v2030 = vrot.slane %v2029, 4
        %v2031 = vadd.f32 %v2029, %v2030
        %v2032 = vrot.slane %v2031, 2
        %v2033 = vadd.f32 %v2031, %v2032
        %v2034 = vrot.slane %v2033, 1
        %v2035 = vadd.f32 %v2033, %v2034
        %s2036 = vtos %v2035
        %v2037 = vstv %s2036
        %2038 = vst [vmem:[%s203] sm:$0xff] %v2037
        %s2039 = sand.u32 %s82, 1
        %s2040 = scalar_lea.sflag [#allocation4], %s2039
        %s2041 = sand.u32 %s82, 1
        %s2042 = smul.addr %s2041, 8
        %s2043 = scalar_lea.vmem [#allocation7], %s2042
        // Predicated region
        $region37: #{tpu_custom_call.1} parent=27 // pred_check
          %p2044 = pneg %p92
        $region38: #{tpu_custom_call.1} parent=27 // pred_check_branch
          %2046 = sbr.rel (%p2044) target = $region40
        $region39: #{tpu_custom_call.1} parent=27 // pred_region
          %s2048 = ssub.s32 128, 128
          %2049 = vsyncadd %s2040, %s2048
          %s2050 = smul.addr %s22, 128
          %s2051 = scalar_lea.hbm %s2, %s2050
          %s2053 = sshll.u32 %s2043, 4
          %s2054 = int_to_ptr.vmem [resolvable:$true] %s2053
          %2056 = dma.vmem_to_hbm [thread:$0]  %s2054, 128, %s2051, %s2040
        $region40: #{tpu_custom_call.1} parent=27 // pred_fallthru
          _
      $region28: #{tpu_custom_call.1} parent=5 // pred_fallthru
        _
      %p2057 = scmp.le.s32.totalorder 2, %s17
      // Predicated region
      $region41: #{tpu_custom_call.1} parent=5 // pred_check
        %p2058 = pneg %p2057
      $region42: #{tpu_custom_call.1} parent=5 // pred_check_branch
        %2060 = sbr.rel (%p2058) target = $region44
      $region43: #{tpu_custom_call.1} parent=5 // pred_region
        %s2061 = ssub.s32 %s17, 2
        // Predicated region
        $region45: #{tpu_custom_call.1} parent=43 // pred_check
          %p2062 = pneg %p98
        $region46: #{tpu_custom_call.1} parent=43 // pred_check_branch
          %2064 = sbr.rel (%p2062) target = $region48
        $region47: #{tpu_custom_call.1} parent=43 // pred_region
          %s2065 = sand.u32 %s83, 1
          %s2066 = scalar_lea.sflag [#allocation4], %s2065
          %s2067 = sand.u32 %s83, 1
          %s2068 = smul.addr %s2067, 8
          %s2069 = scalar_lea.vmem [#allocation7], %s2068
          %2070 = dma.done %s2066, 128
        $region48: #{tpu_custom_call.1} parent=43 // pred_fallthru
          _
      $region44: #{tpu_custom_call.1} parent=5 // pred_fallthru
        _
    $region6: #{tpu_custom_call.1} parent=1 // loop_footer
      %s21 = sadd.s32 1, %s17
    $region7: #{tpu_custom_call.1} parent=1 // loop_footer_branch
      %16 = sbr.rel target = $region3
    $region8: #{tpu_custom_call.1} parent=1 // loop_exit
      _
    %2071 = vsyncpa [#allocation3], 1
    %s2072 = scalar_lea.sflag [#allocation3], 1
    %2073 = vsyncpa %s2072, 1
    %2074 = vsyncpa [#allocation6], 1
    %s2075 = scalar_lea.sflag [#allocation6], 1
    %2076 = vsyncpa %s2075, 1
    %2077 = vsyncpa [#allocation4], 1
    %s2078 = scalar_lea.sflag [#allocation4], 1
    %2079 = vsyncpa %s2078, 1

</llo_original>
